<compile_context>
chip_gen: v5e
topology: v5e:2x2
jax: 0.10.0
libtpu: 0.0.40
codegen_flags: <defaults>
</compile_context>

<pallas_src>
import math
from functools import partial

import jax
import jax.numpy as jnp
from jax.experimental import pallas as pl

# ---------------- model hyper-parameters (small synthetic ALBERT) ----------------
B = 2            # batch
S = 8            # sequence length
VOCAB = 50       # vocab size
MAX_POS = 16     # max position embeddings
EMB = 16         # albert embedding_size
HIDDEN = 32      # hidden_size (= nb_features = ffn_output.out_features)
NH = 2           # num attention heads
DH = HIDDEN // NH
INTER = 64       # intermediate_size
NLAYERS = 2      # num_hidden_layers (ALBERT shares one layer's weights across all of them)
NB_FT = HIDDEN   # nb_ft (defaults to nb_features)
NB_QA_LAYERS = 1 # self.nb_layers -> features = last hidden state only
PAD_IDX = 0      # 'roberta' not in 'albert-base-v2'
LN_EPS = 1e-12
MASK_NEG = -10000.0
OUT_PAD = 128    # lane-dense padded logit width (real logits live in columns 0:2)


def _layernorm(x, g, b):
    mu = jnp.mean(x, axis=-1, keepdims=True)
    var = jnp.mean((x - mu) * (x - mu), axis=-1, keepdims=True)
    return (x - mu) * jax.lax.rsqrt(var + LN_EPS) * g + b


def _gelu_new(x):
    # matches HF "gelu_new" (tanh approximation)
    return jax.nn.gelu(x, approximate=True)


def _mm(a, w):
    # bf16 MXU operands, f32 accumulation
    return jnp.dot(a.astype(jnp.bfloat16), w, preferred_element_type=jnp.float32)


def tweetqa_kernel(x_ref, maskb_ref,
                   ln_e_g, ln_e_b, w_map, b_map,
                   wqkv, bqkv, wo, bo, ln1_g, ln1_b,
                   w1, b1, w2, b2, ln2_g, ln2_b,
                   wh1, bh1, wh2, bh2,
                   out_ref, *, bsz, seq):
    # whole batch in one invocation; dense layers on flat (B*S, F) tiles
    x = _layernorm(x_ref[...], ln_e_g[...], ln_e_b[...])          # (B*S, EMB) f32
    mask_bias = maskb_ref[...]                                     # (B, 1, S) additive bias

    # albert encoder: embedding_hidden_mapping_in
    h = _mm(x, w_map[...]) + b_map[...]                            # (B*S, HIDDEN) f32

    # ALBERT: the same layer weights are applied NLAYERS times
    for _ in range(NLAYERS):
        # fused QKV matmul; 1/sqrt(DH) already folded into the Q columns host-side
        qkv = _mm(h, wqkv[...]) + bqkv[...]                        # (B*S, 3*HIDDEN)
        qkv3 = qkv.reshape(bsz, seq, 3 * HIDDEN)                   # (B, S, 3*HIDDEN)

        ctx_heads = []
        for hd in range(NH):                                       # static 2-way unroll
            lo = hd * DH
            qh = qkv3[:, :, lo:lo + DH].astype(jnp.bfloat16)                       # (B,S,DH)
            kh = qkv3[:, :, HIDDEN + lo:HIDDEN + lo + DH].astype(jnp.bfloat16)     # (B,S,DH)
            vh = qkv3[:, :, 2 * HIDDEN + lo:2 * HIDDEN + lo + DH].astype(jnp.bfloat16)

            # scores: batched contraction over DH (no explicit transpose)
            sc = jax.lax.dot_general(qh, kh, (((2,), (2,)), ((0,), (0,))),
                                     preferred_element_type=jnp.float32)           # (B,S,S)
            sc = sc + mask_bias
            sc = sc - jnp.max(sc, axis=-1, keepdims=True)
            p = jnp.exp(sc)
            p = p * pl.reciprocal(jnp.sum(p, axis=-1, keepdims=True), approx=True)

            # context: batched (S,S) @ (S,DH)
            ctx_heads.append(jax.lax.dot_general(p.astype(jnp.bfloat16), vh,
                                                 (((2,), (1,)), ((0,), (0,))),
                                                 preferred_element_type=jnp.float32))
        ctx = jnp.concatenate(ctx_heads, axis=-1).reshape(bsz * seq, HIDDEN)

        attn_out = _mm(ctx, wo[...]) + bo[...]
        h = _layernorm(h + attn_out, ln1_g[...], ln1_b[...])

        ff = _gelu_new(_mm(h, w1[...]) + b1[...])
        ff_out = _mm(ff, w2[...]) + b2[...]
        h = _layernorm(h + ff_out, ln2_g[...], ln2_b[...])

    # features = last hidden state (nb_layers=1); QA head: Linear -> Tanh -> Linear(.., 2)
    z = jnp.tanh(_mm(h, wh1[...]) + bh1[...])
    # lane-dense padded logits; real (start, end) logits are columns 0:2
    out_ref[...] = _mm(z, wh2[...]) + bh2[...]                     # (B*S, OUT_PAD)


def init_params(key):
    ks = jax.random.split(key, 16)
    n = lambda k, shape: (0.02 * jax.random.normal(k, shape)).astype(jnp.float32)
    zeros = lambda shape: jnp.zeros(shape, jnp.float32)
    ones = lambda shape: jnp.ones(shape, jnp.float32)
    return dict(
        word_emb=n(ks[0], (VOCAB, EMB)),
        pos_emb=n(ks[1], (MAX_POS, EMB)),
        type_emb=n(ks[2], (2, EMB)),
        ln_e_g=ones((1, EMB)), ln_e_b=zeros((1, EMB)),
        w_map=n(ks[3], (EMB, HIDDEN)), b_map=zeros((1, HIDDEN)),
        wq=n(ks[4], (HIDDEN, HIDDEN)), bq=zeros((1, HIDDEN)),
        wk=n(ks[5], (HIDDEN, HIDDEN)), bk=zeros((1, HIDDEN)),
        wv=n(ks[6], (HIDDEN, HIDDEN)), bv=zeros((1, HIDDEN)),
        wo=n(ks[7], (HIDDEN, HIDDEN)), bo=zeros((1, HIDDEN)),
        ln1_g=ones((1, HIDDEN)), ln1_b=zeros((1, HIDDEN)),
        w1=n(ks[8], (HIDDEN, INTER)), b1=zeros((1, INTER)),
        w2=n(ks[9], (INTER, HIDDEN)), b2=zeros((1, HIDDEN)),
        ln2_g=ones((1, HIDDEN)), ln2_b=zeros((1, HIDDEN)),
        wh1=n(ks[10], (HIDDEN * NB_QA_LAYERS, NB_FT)), bh1=zeros((1, NB_FT)),
        wh2=n(ks[11], (NB_FT, 2)), bh2=zeros((1, 2)),
    )


def _prepare_weights(params):
    """One-time host-side weight transforms: QKV fusion, scale fold, lane-dense pad, bf16."""
    scale = 1.0 / math.sqrt(DH)
    wqkv = jnp.concatenate([params["wq"] * scale, params["wk"], params["wv"]], axis=1)
    bqkv = jnp.concatenate([params["bq"] * scale, params["bk"], params["bv"]], axis=1)
    wh2p = jnp.zeros((NB_FT, OUT_PAD), jnp.float32).at[:, :2].set(params["wh2"])
    bh2p = jnp.zeros((1, OUT_PAD), jnp.float32).at[:, :2].set(params["bh2"])
    bf16 = lambda w: w.astype(jnp.bfloat16)
    return [
        params["ln_e_g"], params["ln_e_b"],
        bf16(params["w_map"]), params["b_map"],
        bf16(wqkv), bqkv,
        bf16(params["wo"]), params["bo"], params["ln1_g"], params["ln1_b"],
        bf16(params["w1"]), params["b1"],
        bf16(params["w2"]), params["b2"], params["ln2_g"], params["ln2_b"],
        bf16(params["wh1"]), params["bh1"],
        bf16(wh2p), bh2p,
    ]


def tweetqa_forward(tokens, token_type_ids, params):
    bsz, seq = tokens.shape

    # --- embedding gathers (glue, plain JAX) ---
    word = params["word_emb"][tokens]                              # (B, S, EMB)
    pos = params["pos_emb"][jnp.arange(seq)][None, :, :]           # (1, S, EMB)
    typ = params["type_emb"][token_type_ids]                       # (B, S, EMB)
    emb = (word + pos + typ).astype(jnp.float32).reshape(bsz * seq, EMB)

    # additive attention-mask bias, HF convention: 0 for keep, -10000 for pad
    mask_bias = ((tokens == PAD_IDX).astype(jnp.float32) * MASK_NEG)[:, None, :]  # (B,1,S)

    weights = _prepare_weights(params)

    # single invocation, no grid: every operand is a full-array VMEM block loaded once
    out = pl.pallas_call(
        partial(tweetqa_kernel, bsz=bsz, seq=seq),
        out_shape=jax.ShapeDtypeStruct((bsz * seq, OUT_PAD), jnp.float32),
    )(emb, mask_bias, *weights)

    logits = out.reshape(bsz, seq, OUT_PAD)[:, :, :2]
    start_logits = logits[:, :, 0]
    end_logits = logits[:, :, 1]
    return start_logits, end_logits


if __name__ == "__main__":
    key = jax.random.PRNGKey(0)
    tok_key, param_key = jax.random.split(key)
    tokens = jax.random.randint(tok_key, (B, S), 1, VOCAB).astype(jnp.int32)
    tokens = tokens.at[1, -2:].set(PAD_IDX)        # some padding so the attention mask matters
    token_type_ids = jnp.zeros((B, S), jnp.int32).at[:, S // 2:].set(1)

    params = init_params(jax.random.PRNGKey(42))

    start_logits, end_logits = tweetqa_forward(tokens, token_type_ids, params)
    jax.block_until_ready((start_logits, end_logits))

    assert start_logits.shape == (B, S) and end_logits.shape == (B, S)
    assert start_logits.dtype == jnp.float32 and end_logits.dtype == jnp.float32
    assert bool(jnp.all(jnp.isfinite(start_logits))) and bool(jnp.all(jnp.isfinite(end_logits)))
    print("KERNEL_OK")
</pallas_src>

<mosaic_0001>
module attributes {stable_mosaic.version = 11 : i64} {
  func.func @tweetqa_kernel(%arg0: memref<16x16xf32, #tpu.memory_space<vmem>>, %arg1: memref<2x1x8xf32, #tpu.memory_space<vmem>>, %arg2: memref<1x16xf32, #tpu.memory_space<vmem>>, %arg3: memref<1x16xf32, #tpu.memory_space<vmem>>, %arg4: memref<16x32xbf16, #tpu.memory_space<vmem>>, %arg5: memref<1x32xf32, #tpu.memory_space<vmem>>, %arg6: memref<32x96xbf16, #tpu.memory_space<vmem>>, %arg7: memref<1x96xf32, #tpu.memory_space<vmem>>, %arg8: memref<32x32xbf16, #tpu.memory_space<vmem>>, %arg9: memref<1x32xf32, #tpu.memory_space<vmem>>, %arg10: memref<1x32xf32, #tpu.memory_space<vmem>>, %arg11: memref<1x32xf32, #tpu.memory_space<vmem>>, %arg12: memref<32x64xbf16, #tpu.memory_space<vmem>>, %arg13: memref<1x64xf32, #tpu.memory_space<vmem>>, %arg14: memref<64x32xbf16, #tpu.memory_space<vmem>>, %arg15: memref<1x32xf32, #tpu.memory_space<vmem>>, %arg16: memref<1x32xf32, #tpu.memory_space<vmem>>, %arg17: memref<1x32xf32, #tpu.memory_space<vmem>>, %arg18: memref<32x32xbf16, #tpu.memory_space<vmem>>, %arg19: memref<1x32xf32, #tpu.memory_space<vmem>>, %arg20: memref<32x128xbf16, #tpu.memory_space<vmem>>, %arg21: memref<1x128xf32, #tpu.memory_space<vmem>>, %arg22: memref<16x128xf32, #tpu.memory_space<vmem>>) attributes {dimension_semantics = [], scalar_prefetch = 0 : i64, scratch_operands = 0 : i64, tpu.core_type = #tpu.core_type<tc>} {
    %c0 = arith.constant 0 : index
    %c0_0 = arith.constant 0 : index
    %0 = vector.load %arg0[%c0, %c0_0] : memref<16x16xf32, #tpu.memory_space<vmem>>, vector<16x16xf32>
    %c0_1 = arith.constant 0 : index
    %c0_2 = arith.constant 0 : index
    %1 = vector.load %arg2[%c0_1, %c0_2] : memref<1x16xf32, #tpu.memory_space<vmem>>, vector<1x16xf32>
    %c0_3 = arith.constant 0 : index
    %c0_4 = arith.constant 0 : index
    %2 = vector.load %arg3[%c0_3, %c0_4] : memref<1x16xf32, #tpu.memory_space<vmem>>, vector<1x16xf32>
    %cst = arith.constant dense<0.000000e+00> : vector<16xf32>
    %3 = vector.multi_reduction <add>, %0, %cst [1] : vector<16x16xf32> to vector<16xf32>
    %4 = vector.shape_cast %3 : vector<16xf32> to vector<16x1xf32>
    %cst_5 = arith.constant 1.600000e+01 : f32
    %5 = vector.broadcast %cst_5 : f32 to vector<16x1xf32>
    %6 = arith.divf %4, %5 : vector<16x1xf32>
    %7 = vector.broadcast %6 : vector<16x1xf32> to vector<16x16xf32>
    %8 = arith.subf %0, %7 : vector<16x16xf32>
    %9 = vector.broadcast %6 : vector<16x1xf32> to vector<16x16xf32>
    %10 = arith.subf %0, %9 : vector<16x16xf32>
    %11 = arith.mulf %8, %10 : vector<16x16xf32>
    %cst_6 = arith.constant dense<0.000000e+00> : vector<16xf32>
    %12 = vector.multi_reduction <add>, %11, %cst_6 [1] : vector<16x16xf32> to vector<16xf32>
    %13 = vector.shape_cast %12 : vector<16xf32> to vector<16x1xf32>
    %cst_7 = arith.constant 1.600000e+01 : f32
    %14 = vector.broadcast %cst_7 : f32 to vector<16x1xf32>
    %15 = arith.divf %13, %14 : vector<16x1xf32>
    %16 = vector.broadcast %6 : vector<16x1xf32> to vector<16x16xf32>
    %17 = arith.subf %0, %16 : vector<16x16xf32>
    %cst_8 = arith.constant 9.99999996E-13 : f32
    %18 = vector.broadcast %cst_8 : f32 to vector<16x1xf32>
    %19 = arith.addf %15, %18 : vector<16x1xf32>
    %20 = math.rsqrt %19 : vector<16x1xf32>
    %21 = vector.broadcast %20 : vector<16x1xf32> to vector<16x16xf32>
    %22 = arith.mulf %17, %21 : vector<16x16xf32>
    %23 = vector.broadcast %1 : vector<1x16xf32> to vector<16x16xf32>
    %24 = arith.mulf %22, %23 : vector<16x16xf32>
    %25 = vector.broadcast %2 : vector<1x16xf32> to vector<16x16xf32>
    %26 = arith.addf %24, %25 : vector<16x16xf32>
    %c0_9 = arith.constant 0 : index
    %c0_10 = arith.constant 0 : index
    %c0_11 = arith.constant 0 : index
    %27 = vector.load %arg1[%c0_9, %c0_10, %c0_11] : memref<2x1x8xf32, #tpu.memory_space<vmem>>, vector<2x1x8xf32>
    %c0_12 = arith.constant 0 : index
    %c0_13 = arith.constant 0 : index
    %28 = vector.load %arg4[%c0_12, %c0_13] : memref<16x32xbf16, #tpu.memory_space<vmem>>, vector<16x32xbf16>
    %29 = arith.truncf %26 : vector<16x16xf32> to vector<16x16xbf16>
    %cst_14 = arith.constant dense<0.000000e+00> : vector<16x32xf32>
    %30 = tpu.matmul %29, %28, %cst_14 {dimension_numbers = #tpu.dot_dimension_numbers<[1], [0], [0], [1], [0, 0, 1, 1], [], []>} : vector<16x16xbf16>, vector<16x32xbf16>, vector<16x32xf32> -> vector<16x32xf32>
    %c0_15 = arith.constant 0 : index
    %c0_16 = arith.constant 0 : index
    %31 = vector.load %arg5[%c0_15, %c0_16] : memref<1x32xf32, #tpu.memory_space<vmem>>, vector<1x32xf32>
    %32 = vector.broadcast %31 : vector<1x32xf32> to vector<16x32xf32>
    %33 = arith.addf %30, %32 : vector<16x32xf32>
    %c0_17 = arith.constant 0 : index
    %c0_18 = arith.constant 0 : index
    %34 = vector.load %arg6[%c0_17, %c0_18] : memref<32x96xbf16, #tpu.memory_space<vmem>>, vector<32x96xbf16>
    %35 = arith.truncf %33 : vector<16x32xf32> to vector<16x32xbf16>
    %cst_19 = arith.constant dense<0.000000e+00> : vector<16x96xf32>
    %36 = tpu.matmul %35, %34, %cst_19 {dimension_numbers = #tpu.dot_dimension_numbers<[1], [0], [0], [1], [0, 0, 1, 1], [], []>} : vector<16x32xbf16>, vector<32x96xbf16>, vector<16x96xf32> -> vector<16x96xf32>
    %c0_20 = arith.constant 0 : index
    %c0_21 = arith.constant 0 : index
    %37 = vector.load %arg7[%c0_20, %c0_21] : memref<1x96xf32, #tpu.memory_space<vmem>>, vector<1x96xf32>
    %38 = vector.broadcast %37 : vector<1x96xf32> to vector<16x96xf32>
    %39 = arith.addf %36, %38 : vector<16x96xf32>
    %40 = vector.shape_cast %39 : vector<16x96xf32> to vector<2x8x96xf32>
    %41 = vector.extract_strided_slice %40 {offsets = [0, 0, 0], sizes = [2, 8, 16], strides = [1, 1, 1]} : vector<2x8x96xf32> to vector<2x8x16xf32>
    %42 = arith.truncf %41 : vector<2x8x16xf32> to vector<2x8x16xbf16>
    %43 = vector.extract_strided_slice %40 {offsets = [0, 0, 32], sizes = [2, 8, 16], strides = [1, 1, 1]} : vector<2x8x96xf32> to vector<2x8x16xf32>
    %44 = arith.truncf %43 : vector<2x8x16xf32> to vector<2x8x16xbf16>
    %45 = vector.extract_strided_slice %40 {offsets = [0, 0, 64], sizes = [2, 8, 16], strides = [1, 1, 1]} : vector<2x8x96xf32> to vector<2x8x16xf32>
    %46 = arith.truncf %45 : vector<2x8x16xf32> to vector<2x8x16xbf16>
    %cst_22 = arith.constant dense<0.000000e+00> : vector<2x8x8xf32>
    %47 = tpu.matmul %42, %44, %cst_22 {dimension_numbers = #tpu.dot_dimension_numbers<[2], [2], [1], [1], [0, 0, 0, 1, 1, 1], [0], [0]>} : vector<2x8x16xbf16>, vector<2x8x16xbf16>, vector<2x8x8xf32> -> vector<2x8x8xf32>
    %48 = vector.broadcast %27 : vector<2x1x8xf32> to vector<2x8x8xf32>
    %49 = arith.addf %47, %48 : vector<2x8x8xf32>
    %cst_23 = arith.constant dense<0xFF800000> : vector<2x8xf32>
    %50 = vector.multi_reduction <maximumf>, %49, %cst_23 [2] : vector<2x8x8xf32> to vector<2x8xf32>
    %51 = vector.shape_cast %50 : vector<2x8xf32> to vector<2x8x1xf32>
    %52 = vector.broadcast %51 : vector<2x8x1xf32> to vector<2x8x8xf32>
    %53 = arith.subf %49, %52 : vector<2x8x8xf32>
    %54 = math.exp %53 : vector<2x8x8xf32>
    %cst_24 = arith.constant dense<0.000000e+00> : vector<2x8xf32>
    %55 = vector.multi_reduction <add>, %54, %cst_24 [2] : vector<2x8x8xf32> to vector<2x8xf32>
    %56 = vector.shape_cast %55 : vector<2x8xf32> to vector<2x8x1xf32>
    %57 = tpu.reciprocal %56 {approx = true} : vector<2x8x1xf32> -> vector<2x8x1xf32>
    %58 = vector.broadcast %57 : vector<2x8x1xf32> to vector<2x8x8xf32>
    %59 = arith.mulf %54, %58 : vector<2x8x8xf32>
    %60 = arith.truncf %59 : vector<2x8x8xf32> to vector<2x8x8xbf16>
    %cst_25 = arith.constant dense<0.000000e+00> : vector<2x8x16xf32>
    %61 = tpu.matmul %60, %46, %cst_25 {dimension_numbers = #tpu.dot_dimension_numbers<[2], [1], [1], [2], [0, 0, 0, 1, 1, 2], [0], [0]>} : vector<2x8x8xbf16>, vector<2x8x16xbf16>, vector<2x8x16xf32> -> vector<2x8x16xf32>
    %62 = vector.extract_strided_slice %40 {offsets = [0, 0, 16], sizes = [2, 8, 16], strides = [1, 1, 1]} : vector<2x8x96xf32> to vector<2x8x16xf32>
    %63 = arith.truncf %62 : vector<2x8x16xf32> to vector<2x8x16xbf16>
    %64 = vector.extract_strided_slice %40 {offsets = [0, 0, 48], sizes = [2, 8, 16], strides = [1, 1, 1]} : vector<2x8x96xf32> to vector<2x8x16xf32>
    %65 = arith.truncf %64 : vector<2x8x16xf32> to vector<2x8x16xbf16>
    %66 = vector.extract_strided_slice %40 {offsets = [0, 0, 80], sizes = [2, 8, 16], strides = [1, 1, 1]} : vector<2x8x96xf32> to vector<2x8x16xf32>
    %67 = arith.truncf %66 : vector<2x8x16xf32> to vector<2x8x16xbf16>
    %cst_26 = arith.constant dense<0.000000e+00> : vector<2x8x8xf32>
    %68 = tpu.matmul %63, %65, %cst_26 {dimension_numbers = #tpu.dot_dimension_numbers<[2], [2], [1], [1], [0, 0, 0, 1, 1, 1], [0], [0]>} : vector<2x8x16xbf16>, vector<2x8x16xbf16>, vector<2x8x8xf32> -> vector<2x8x8xf32>
    %69 = vector.broadcast %27 : vector<2x1x8xf32> to vector<2x8x8xf32>
    %70 = arith.addf %68, %69 : vector<2x8x8xf32>
    %cst_27 = arith.constant dense<0xFF800000> : vector<2x8xf32>
    %71 = vector.multi_reduction <maximumf>, %70, %cst_27 [2] : vector<2x8x8xf32> to vector<2x8xf32>
    %72 = vector.shape_cast %71 : vector<2x8xf32> to vector<2x8x1xf32>
    %73 = vector.broadcast %72 : vector<2x8x1xf32> to vector<2x8x8xf32>
    %74 = arith.subf %70, %73 : vector<2x8x8xf32>
    %75 = math.exp %74 : vector<2x8x8xf32>
    %cst_28 = arith.constant dense<0.000000e+00> : vector<2x8xf32>
    %76 = vector.multi_reduction <add>, %75, %cst_28 [2] : vector<2x8x8xf32> to vector<2x8xf32>
    %77 = vector.shape_cast %76 : vector<2x8xf32> to vector<2x8x1xf32>
    %78 = tpu.reciprocal %77 {approx = true} : vector<2x8x1xf32> -> vector<2x8x1xf32>
    %79 = vector.broadcast %78 : vector<2x8x1xf32> to vector<2x8x8xf32>
    %80 = arith.mulf %75, %79 : vector<2x8x8xf32>
    %81 = arith.truncf %80 : vector<2x8x8xf32> to vector<2x8x8xbf16>
    %cst_29 = arith.constant dense<0.000000e+00> : vector<2x8x16xf32>
    %82 = tpu.matmul %81, %67, %cst_29 {dimension_numbers = #tpu.dot_dimension_numbers<[2], [1], [1], [2], [0, 0, 0, 1, 1, 2], [0], [0]>} : vector<2x8x8xbf16>, vector<2x8x16xbf16>, vector<2x8x16xf32> -> vector<2x8x16xf32>
    %83 = tpu.concatenate %61, %82 in 2 : vector<2x8x16xf32>, vector<2x8x16xf32> -> vector<2x8x32xf32>
    %84 = vector.shape_cast %83 : vector<2x8x32xf32> to vector<16x32xf32>
    %c0_30 = arith.constant 0 : index
    %c0_31 = arith.constant 0 : index
    %85 = vector.load %arg8[%c0_30, %c0_31] : memref<32x32xbf16, #tpu.memory_space<vmem>>, vector<32x32xbf16>
    %86 = arith.truncf %84 : vector<16x32xf32> to vector<16x32xbf16>
    %cst_32 = arith.constant dense<0.000000e+00> : vector<16x32xf32>
    %87 = tpu.matmul %86, %85, %cst_32 {dimension_numbers = #tpu.dot_dimension_numbers<[1], [0], [0], [1], [0, 0, 1, 1], [], []>} : vector<16x32xbf16>, vector<32x32xbf16>, vector<16x32xf32> -> vector<16x32xf32>
    %c0_33 = arith.constant 0 : index
    %c0_34 = arith.constant 0 : index
    %88 = vector.load %arg9[%c0_33, %c0_34] : memref<1x32xf32, #tpu.memory_space<vmem>>, vector<1x32xf32>
    %89 = vector.broadcast %88 : vector<1x32xf32> to vector<16x32xf32>
    %90 = arith.addf %87, %89 : vector<16x32xf32>
    %91 = arith.addf %33, %90 : vector<16x32xf32>
    %c0_35 = arith.constant 0 : index
    %c0_36 = arith.constant 0 : index
    %92 = vector.load %arg10[%c0_35, %c0_36] : memref<1x32xf32, #tpu.memory_space<vmem>>, vector<1x32xf32>
    %c0_37 = arith.constant 0 : index
    %c0_38 = arith.constant 0 : index
    %93 = vector.load %arg11[%c0_37, %c0_38] : memref<1x32xf32, #tpu.memory_space<vmem>>, vector<1x32xf32>
    %cst_39 = arith.constant dense<0.000000e+00> : vector<16xf32>
    %94 = vector.multi_reduction <add>, %91, %cst_39 [1] : vector<16x32xf32> to vector<16xf32>
    %95 = vector.shape_cast %94 : vector<16xf32> to vector<16x1xf32>
    %cst_40 = arith.constant 3.200000e+01 : f32
    %96 = vector.broadcast %cst_40 : f32 to vector<16x1xf32>
    %97 = arith.divf %95, %96 : vector<16x1xf32>
    %98 = vector.broadcast %97 : vector<16x1xf32> to vector<16x32xf32>
    %99 = arith.subf %91, %98 : vector<16x32xf32>
    %100 = vector.broadcast %97 : vector<16x1xf32> to vector<16x32xf32>
    %101 = arith.subf %91, %100 : vector<16x32xf32>
    %102 = arith.mulf %99, %101 : vector<16x32xf32>
    %cst_41 = arith.constant dense<0.000000e+00> : vector<16xf32>
    %103 = vector.multi_reduction <add>, %102, %cst_41 [1] : vector<16x32xf32> to vector<16xf32>
    %104 = vector.shape_cast %103 : vector<16xf32> to vector<16x1xf32>
    %cst_42 = arith.constant 3.200000e+01 : f32
    %105 = vector.broadcast %cst_42 : f32 to vector<16x1xf32>
    %106 = arith.divf %104, %105 : vector<16x1xf32>
    %107 = vector.broadcast %97 : vector<16x1xf32> to vector<16x32xf32>
    %108 = arith.subf %91, %107 : vector<16x32xf32>
    %cst_43 = arith.constant 9.99999996E-13 : f32
    %109 = vector.broadcast %cst_43 : f32 to vector<16x1xf32>
    %110 = arith.addf %106, %109 : vector<16x1xf32>
    %111 = math.rsqrt %110 : vector<16x1xf32>
    %112 = vector.broadcast %111 : vector<16x1xf32> to vector<16x32xf32>
    %113 = arith.mulf %108, %112 : vector<16x32xf32>
    %114 = vector.broadcast %92 : vector<1x32xf32> to vector<16x32xf32>
    %115 = arith.mulf %113, %114 : vector<16x32xf32>
    %116 = vector.broadcast %93 : vector<1x32xf32> to vector<16x32xf32>
    %117 = arith.addf %115, %116 : vector<16x32xf32>
    %c0_44 = arith.constant 0 : index
    %c0_45 = arith.constant 0 : index
    %118 = vector.load %arg12[%c0_44, %c0_45] : memref<32x64xbf16, #tpu.memory_space<vmem>>, vector<32x64xbf16>
    %119 = arith.truncf %117 : vector<16x32xf32> to vector<16x32xbf16>
    %cst_46 = arith.constant dense<0.000000e+00> : vector<16x64xf32>
    %120 = tpu.matmul %119, %118, %cst_46 {dimension_numbers = #tpu.dot_dimension_numbers<[1], [0], [0], [1], [0, 0, 1, 1], [], []>} : vector<16x32xbf16>, vector<32x64xbf16>, vector<16x64xf32> -> vector<16x64xf32>
    %c0_47 = arith.constant 0 : index
    %c0_48 = arith.constant 0 : index
    %121 = vector.load %arg13[%c0_47, %c0_48] : memref<1x64xf32, #tpu.memory_space<vmem>>, vector<1x64xf32>
    %122 = vector.broadcast %121 : vector<1x64xf32> to vector<16x64xf32>
    %123 = arith.addf %120, %122 : vector<16x64xf32>
    %124 = arith.mulf %123, %123 : vector<16x64xf32>
    %125 = arith.mulf %123, %124 : vector<16x64xf32>
    %cst_49 = arith.constant 4.471500e-02 : f32
    %126 = vector.broadcast %cst_49 : f32 to vector<16x64xf32>
    %127 = arith.mulf %126, %125 : vector<16x64xf32>
    %128 = arith.addf %123, %127 : vector<16x64xf32>
    %cst_50 = arith.constant 0.797884583 : f32
    %129 = vector.broadcast %cst_50 : f32 to vector<16x64xf32>
    %130 = arith.mulf %129, %128 : vector<16x64xf32>
    %131 = math.tanh %130 : vector<16x64xf32>
    %cst_51 = arith.constant 1.000000e+00 : f32
    %132 = vector.broadcast %cst_51 : f32 to vector<16x64xf32>
    %133 = arith.addf %132, %131 : vector<16x64xf32>
    %cst_52 = arith.constant 5.000000e-01 : f32
    %134 = vector.broadcast %cst_52 : f32 to vector<16x64xf32>
    %135 = arith.mulf %134, %133 : vector<16x64xf32>
    %136 = arith.mulf %123, %135 : vector<16x64xf32>
    %c0_53 = arith.constant 0 : index
    %c0_54 = arith.constant 0 : index
    %137 = vector.load %arg14[%c0_53, %c0_54] : memref<64x32xbf16, #tpu.memory_space<vmem>>, vector<64x32xbf16>
    %138 = arith.truncf %136 : vector<16x64xf32> to vector<16x64xbf16>
    %cst_55 = arith.constant dense<0.000000e+00> : vector<16x32xf32>
    %139 = tpu.matmul %138, %137, %cst_55 {dimension_numbers = #tpu.dot_dimension_numbers<[1], [0], [0], [1], [0, 0, 1, 1], [], []>} : vector<16x64xbf16>, vector<64x32xbf16>, vector<16x32xf32> -> vector<16x32xf32>
    %c0_56 = arith.constant 0 : index
    %c0_57 = arith.constant 0 : index
    %140 = vector.load %arg15[%c0_56, %c0_57] : memref<1x32xf32, #tpu.memory_space<vmem>>, vector<1x32xf32>
    %141 = vector.broadcast %140 : vector<1x32xf32> to vector<16x32xf32>
    %142 = arith.addf %139, %141 : vector<16x32xf32>
    %143 = arith.addf %117, %142 : vector<16x32xf32>
    %c0_58 = arith.constant 0 : index
    %c0_59 = arith.constant 0 : index
    %144 = vector.load %arg16[%c0_58, %c0_59] : memref<1x32xf32, #tpu.memory_space<vmem>>, vector<1x32xf32>
    %c0_60 = arith.constant 0 : index
    %c0_61 = arith.constant 0 : index
    %145 = vector.load %arg17[%c0_60, %c0_61] : memref<1x32xf32, #tpu.memory_space<vmem>>, vector<1x32xf32>
    %cst_62 = arith.constant dense<0.000000e+00> : vector<16xf32>
    %146 = vector.multi_reduction <add>, %143, %cst_62 [1] : vector<16x32xf32> to vector<16xf32>
    %147 = vector.shape_cast %146 : vector<16xf32> to vector<16x1xf32>
    %cst_63 = arith.constant 3.200000e+01 : f32
    %148 = vector.broadcast %cst_63 : f32 to vector<16x1xf32>
    %149 = arith.divf %147, %148 : vector<16x1xf32>
    %150 = vector.broadcast %149 : vector<16x1xf32> to vector<16x32xf32>
    %151 = arith.subf %143, %150 : vector<16x32xf32>
    %152 = vector.broadcast %149 : vector<16x1xf32> to vector<16x32xf32>
    %153 = arith.subf %143, %152 : vector<16x32xf32>
    %154 = arith.mulf %151, %153 : vector<16x32xf32>
    %cst_64 = arith.constant dense<0.000000e+00> : vector<16xf32>
    %155 = vector.multi_reduction <add>, %154, %cst_64 [1] : vector<16x32xf32> to vector<16xf32>
    %156 = vector.shape_cast %155 : vector<16xf32> to vector<16x1xf32>
    %cst_65 = arith.constant 3.200000e+01 : f32
    %157 = vector.broadcast %cst_65 : f32 to vector<16x1xf32>
    %158 = arith.divf %156, %157 : vector<16x1xf32>
    %159 = vector.broadcast %149 : vector<16x1xf32> to vector<16x32xf32>
    %160 = arith.subf %143, %159 : vector<16x32xf32>
    %cst_66 = arith.constant 9.99999996E-13 : f32
    %161 = vector.broadcast %cst_66 : f32 to vector<16x1xf32>
    %162 = arith.addf %158, %161 : vector<16x1xf32>
    %163 = math.rsqrt %162 : vector<16x1xf32>
    %164 = vector.broadcast %163 : vector<16x1xf32> to vector<16x32xf32>
    %165 = arith.mulf %160, %164 : vector<16x32xf32>
    %166 = vector.broadcast %144 : vector<1x32xf32> to vector<16x32xf32>
    %167 = arith.mulf %165, %166 : vector<16x32xf32>
    %168 = vector.broadcast %145 : vector<1x32xf32> to vector<16x32xf32>
    %169 = arith.addf %167, %168 : vector<16x32xf32>
    %c0_67 = arith.constant 0 : index
    %c0_68 = arith.constant 0 : index
    %170 = vector.load %arg6[%c0_67, %c0_68] : memref<32x96xbf16, #tpu.memory_space<vmem>>, vector<32x96xbf16>
    %171 = arith.truncf %169 : vector<16x32xf32> to vector<16x32xbf16>
    %cst_69 = arith.constant dense<0.000000e+00> : vector<16x96xf32>
    %172 = tpu.matmul %171, %170, %cst_69 {dimension_numbers = #tpu.dot_dimension_numbers<[1], [0], [0], [1], [0, 0, 1, 1], [], []>} : vector<16x32xbf16>, vector<32x96xbf16>, vector<16x96xf32> -> vector<16x96xf32>
    %c0_70 = arith.constant 0 : index
    %c0_71 = arith.constant 0 : index
    %173 = vector.load %arg7[%c0_70, %c0_71] : memref<1x96xf32, #tpu.memory_space<vmem>>, vector<1x96xf32>
    %174 = vector.broadcast %173 : vector<1x96xf32> to vector<16x96xf32>
    %175 = arith.addf %172, %174 : vector<16x96xf32>
    %176 = vector.shape_cast %175 : vector<16x96xf32> to vector<2x8x96xf32>
    %177 = vector.extract_strided_slice %176 {offsets = [0, 0, 0], sizes = [2, 8, 16], strides = [1, 1, 1]} : vector<2x8x96xf32> to vector<2x8x16xf32>
    %178 = arith.truncf %177 : vector<2x8x16xf32> to vector<2x8x16xbf16>
    %179 = vector.extract_strided_slice %176 {offsets = [0, 0, 32], sizes = [2, 8, 16], strides = [1, 1, 1]} : vector<2x8x96xf32> to vector<2x8x16xf32>
    %180 = arith.truncf %179 : vector<2x8x16xf32> to vector<2x8x16xbf16>
    %181 = vector.extract_strided_slice %176 {offsets = [0, 0, 64], sizes = [2, 8, 16], strides = [1, 1, 1]} : vector<2x8x96xf32> to vector<2x8x16xf32>
    %182 = arith.truncf %181 : vector<2x8x16xf32> to vector<2x8x16xbf16>
    %cst_72 = arith.constant dense<0.000000e+00> : vector<2x8x8xf32>
    %183 = tpu.matmul %178, %180, %cst_72 {dimension_numbers = #tpu.dot_dimension_numbers<[2], [2], [1], [1], [0, 0, 0, 1, 1, 1], [0], [0]>} : vector<2x8x16xbf16>, vector<2x8x16xbf16>, vector<2x8x8xf32> -> vector<2x8x8xf32>
    %184 = vector.broadcast %27 : vector<2x1x8xf32> to vector<2x8x8xf32>
    %185 = arith.addf %183, %184 : vector<2x8x8xf32>
    %cst_73 = arith.constant dense<0xFF800000> : vector<2x8xf32>
    %186 = vector.multi_reduction <maximumf>, %185, %cst_73 [2] : vector<2x8x8xf32> to vector<2x8xf32>
    %187 = vector.shape_cast %186 : vector<2x8xf32> to vector<2x8x1xf32>
    %188 = vector.broadcast %187 : vector<2x8x1xf32> to vector<2x8x8xf32>
    %189 = arith.subf %185, %188 : vector<2x8x8xf32>
    %190 = math.exp %189 : vector<2x8x8xf32>
    %cst_74 = arith.constant dense<0.000000e+00> : vector<2x8xf32>
    %191 = vector.multi_reduction <add>, %190, %cst_74 [2] : vector<2x8x8xf32> to vector<2x8xf32>
    %192 = vector.shape_cast %191 : vector<2x8xf32> to vector<2x8x1xf32>
    %193 = tpu.reciprocal %192 {approx = true} : vector<2x8x1xf32> -> vector<2x8x1xf32>
    %194 = vector.broadcast %193 : vector<2x8x1xf32> to vector<2x8x8xf32>
    %195 = arith.mulf %190, %194 : vector<2x8x8xf32>
    %196 = arith.truncf %195 : vector<2x8x8xf32> to vector<2x8x8xbf16>
    %cst_75 = arith.constant dense<0.000000e+00> : vector<2x8x16xf32>
    %197 = tpu.matmul %196, %182, %cst_75 {dimension_numbers = #tpu.dot_dimension_numbers<[2], [1], [1], [2], [0, 0, 0, 1, 1, 2], [0], [0]>} : vector<2x8x8xbf16>, vector<2x8x16xbf16>, vector<2x8x16xf32> -> vector<2x8x16xf32>
    %198 = vector.extract_strided_slice %176 {offsets = [0, 0, 16], sizes = [2, 8, 16], strides = [1, 1, 1]} : vector<2x8x96xf32> to vector<2x8x16xf32>
    %199 = arith.truncf %198 : vector<2x8x16xf32> to vector<2x8x16xbf16>
    %200 = vector.extract_strided_slice %176 {offsets = [0, 0, 48], sizes = [2, 8, 16], strides = [1, 1, 1]} : vector<2x8x96xf32> to vector<2x8x16xf32>
    %201 = arith.truncf %200 : vector<2x8x16xf32> to vector<2x8x16xbf16>
    %202 = vector.extract_strided_slice %176 {offsets = [0, 0, 80], sizes = [2, 8, 16], strides = [1, 1, 1]} : vector<2x8x96xf32> to vector<2x8x16xf32>
    %203 = arith.truncf %202 : vector<2x8x16xf32> to vector<2x8x16xbf16>
    %cst_76 = arith.constant dense<0.000000e+00> : vector<2x8x8xf32>
    %204 = tpu.matmul %199, %201, %cst_76 {dimension_numbers = #tpu.dot_dimension_numbers<[2], [2], [1], [1], [0, 0, 0, 1, 1, 1], [0], [0]>} : vector<2x8x16xbf16>, vector<2x8x16xbf16>, vector<2x8x8xf32> -> vector<2x8x8xf32>
    %205 = vector.broadcast %27 : vector<2x1x8xf32> to vector<2x8x8xf32>
    %206 = arith.addf %204, %205 : vector<2x8x8xf32>
    %cst_77 = arith.constant dense<0xFF800000> : vector<2x8xf32>
    %207 = vector.multi_reduction <maximumf>, %206, %cst_77 [2] : vector<2x8x8xf32> to vector<2x8xf32>
    %208 = vector.shape_cast %207 : vector<2x8xf32> to vector<2x8x1xf32>
    %209 = vector.broadcast %208 : vector<2x8x1xf32> to vector<2x8x8xf32>
    %210 = arith.subf %206, %209 : vector<2x8x8xf32>
    %211 = math.exp %210 : vector<2x8x8xf32>
    %cst_78 = arith.constant dense<0.000000e+00> : vector<2x8xf32>
    %212 = vector.multi_reduction <add>, %211, %cst_78 [2] : vector<2x8x8xf32> to vector<2x8xf32>
    %213 = vector.shape_cast %212 : vector<2x8xf32> to vector<2x8x1xf32>
    %214 = tpu.reciprocal %213 {approx = true} : vector<2x8x1xf32> -> vector<2x8x1xf32>
    %215 = vector.broadcast %214 : vector<2x8x1xf32> to vector<2x8x8xf32>
    %216 = arith.mulf %211, %215 : vector<2x8x8xf32>
    %217 = arith.truncf %216 : vector<2x8x8xf32> to vector<2x8x8xbf16>
    %cst_79 = arith.constant dense<0.000000e+00> : vector<2x8x16xf32>
    %218 = tpu.matmul %217, %203, %cst_79 {dimension_numbers = #tpu.dot_dimension_numbers<[2], [1], [1], [2], [0, 0, 0, 1, 1, 2], [0], [0]>} : vector<2x8x8xbf16>, vector<2x8x16xbf16>, vector<2x8x16xf32> -> vector<2x8x16xf32>
    %219 = tpu.concatenate %197, %218 in 2 : vector<2x8x16xf32>, vector<2x8x16xf32> -> vector<2x8x32xf32>
    %220 = vector.shape_cast %219 : vector<2x8x32xf32> to vector<16x32xf32>
    %c0_80 = arith.constant 0 : index
    %c0_81 = arith.constant 0 : index
    %221 = vector.load %arg8[%c0_80, %c0_81] : memref<32x32xbf16, #tpu.memory_space<vmem>>, vector<32x32xbf16>
    %222 = arith.truncf %220 : vector<16x32xf32> to vector<16x32xbf16>
    %cst_82 = arith.constant dense<0.000000e+00> : vector<16x32xf32>
    %223 = tpu.matmul %222, %221, %cst_82 {dimension_numbers = #tpu.dot_dimension_numbers<[1], [0], [0], [1], [0, 0, 1, 1], [], []>} : vector<16x32xbf16>, vector<32x32xbf16>, vector<16x32xf32> -> vector<16x32xf32>
    %c0_83 = arith.constant 0 : index
    %c0_84 = arith.constant 0 : index
    %224 = vector.load %arg9[%c0_83, %c0_84] : memref<1x32xf32, #tpu.memory_space<vmem>>, vector<1x32xf32>
    %225 = vector.broadcast %224 : vector<1x32xf32> to vector<16x32xf32>
    %226 = arith.addf %223, %225 : vector<16x32xf32>
    %227 = arith.addf %169, %226 : vector<16x32xf32>
    %c0_85 = arith.constant 0 : index
    %c0_86 = arith.constant 0 : index
    %228 = vector.load %arg10[%c0_85, %c0_86] : memref<1x32xf32, #tpu.memory_space<vmem>>, vector<1x32xf32>
    %c0_87 = arith.constant 0 : index
    %c0_88 = arith.constant 0 : index
    %229 = vector.load %arg11[%c0_87, %c0_88] : memref<1x32xf32, #tpu.memory_space<vmem>>, vector<1x32xf32>
    %cst_89 = arith.constant dense<0.000000e+00> : vector<16xf32>
    %230 = vector.multi_reduction <add>, %227, %cst_89 [1] : vector<16x32xf32> to vector<16xf32>
    %231 = vector.shape_cast %230 : vector<16xf32> to vector<16x1xf32>
    %cst_90 = arith.constant 3.200000e+01 : f32
    %232 = vector.broadcast %cst_90 : f32 to vector<16x1xf32>
    %233 = arith.divf %231, %232 : vector<16x1xf32>
    %234 = vector.broadcast %233 : vector<16x1xf32> to vector<16x32xf32>
    %235 = arith.subf %227, %234 : vector<16x32xf32>
    %236 = vector.broadcast %233 : vector<16x1xf32> to vector<16x32xf32>
    %237 = arith.subf %227, %236 : vector<16x32xf32>
    %238 = arith.mulf %235, %237 : vector<16x32xf32>
    %cst_91 = arith.constant dense<0.000000e+00> : vector<16xf32>
    %239 = vector.multi_reduction <add>, %238, %cst_91 [1] : vector<16x32xf32> to vector<16xf32>
    %240 = vector.shape_cast %239 : vector<16xf32> to vector<16x1xf32>
    %cst_92 = arith.constant 3.200000e+01 : f32
    %241 = vector.broadcast %cst_92 : f32 to vector<16x1xf32>
    %242 = arith.divf %240, %241 : vector<16x1xf32>
    %243 = vector.broadcast %233 : vector<16x1xf32> to vector<16x32xf32>
    %244 = arith.subf %227, %243 : vector<16x32xf32>
    %cst_93 = arith.constant 9.99999996E-13 : f32
    %245 = vector.broadcast %cst_93 : f32 to vector<16x1xf32>
    %246 = arith.addf %242, %245 : vector<16x1xf32>
    %247 = math.rsqrt %246 : vector<16x1xf32>
    %248 = vector.broadcast %247 : vector<16x1xf32> to vector<16x32xf32>
    %249 = arith.mulf %244, %248 : vector<16x32xf32>
    %250 = vector.broadcast %228 : vector<1x32xf32> to vector<16x32xf32>
    %251 = arith.mulf %249, %250 : vector<16x32xf32>
    %252 = vector.broadcast %229 : vector<1x32xf32> to vector<16x32xf32>
    %253 = arith.addf %251, %252 : vector<16x32xf32>
    %c0_94 = arith.constant 0 : index
    %c0_95 = arith.constant 0 : index
    %254 = vector.load %arg12[%c0_94, %c0_95] : memref<32x64xbf16, #tpu.memory_space<vmem>>, vector<32x64xbf16>
    %255 = arith.truncf %253 : vector<16x32xf32> to vector<16x32xbf16>
    %cst_96 = arith.constant dense<0.000000e+00> : vector<16x64xf32>
    %256 = tpu.matmul %255, %254, %cst_96 {dimension_numbers = #tpu.dot_dimension_numbers<[1], [0], [0], [1], [0, 0, 1, 1], [], []>} : vector<16x32xbf16>, vector<32x64xbf16>, vector<16x64xf32> -> vector<16x64xf32>
    %c0_97 = arith.constant 0 : index
    %c0_98 = arith.constant 0 : index
    %257 = vector.load %arg13[%c0_97, %c0_98] : memref<1x64xf32, #tpu.memory_space<vmem>>, vector<1x64xf32>
    %258 = vector.broadcast %257 : vector<1x64xf32> to vector<16x64xf32>
    %259 = arith.addf %256, %258 : vector<16x64xf32>
    %260 = arith.mulf %259, %259 : vector<16x64xf32>
    %261 = arith.mulf %259, %260 : vector<16x64xf32>
    %cst_99 = arith.constant 4.471500e-02 : f32
    %262 = vector.broadcast %cst_99 : f32 to vector<16x64xf32>
    %263 = arith.mulf %262, %261 : vector<16x64xf32>
    %264 = arith.addf %259, %263 : vector<16x64xf32>
    %cst_100 = arith.constant 0.797884583 : f32
    %265 = vector.broadcast %cst_100 : f32 to vector<16x64xf32>
    %266 = arith.mulf %265, %264 : vector<16x64xf32>
    %267 = math.tanh %266 : vector<16x64xf32>
    %cst_101 = arith.constant 1.000000e+00 : f32
    %268 = vector.broadcast %cst_101 : f32 to vector<16x64xf32>
    %269 = arith.addf %268, %267 : vector<16x64xf32>
    %cst_102 = arith.constant 5.000000e-01 : f32
    %270 = vector.broadcast %cst_102 : f32 to vector<16x64xf32>
    %271 = arith.mulf %270, %269 : vector<16x64xf32>
    %272 = arith.mulf %259, %271 : vector<16x64xf32>
    %c0_103 = arith.constant 0 : index
    %c0_104 = arith.constant 0 : index
    %273 = vector.load %arg14[%c0_103, %c0_104] : memref<64x32xbf16, #tpu.memory_space<vmem>>, vector<64x32xbf16>
    %274 = arith.truncf %272 : vector<16x64xf32> to vector<16x64xbf16>
    %cst_105 = arith.constant dense<0.000000e+00> : vector<16x32xf32>
    %275 = tpu.matmul %274, %273, %cst_105 {dimension_numbers = #tpu.dot_dimension_numbers<[1], [0], [0], [1], [0, 0, 1, 1], [], []>} : vector<16x64xbf16>, vector<64x32xbf16>, vector<16x32xf32> -> vector<16x32xf32>
    %c0_106 = arith.constant 0 : index
    %c0_107 = arith.constant 0 : index
    %276 = vector.load %arg15[%c0_106, %c0_107] : memref<1x32xf32, #tpu.memory_space<vmem>>, vector<1x32xf32>
    %277 = vector.broadcast %276 : vector<1x32xf32> to vector<16x32xf32>
    %278 = arith.addf %275, %277 : vector<16x32xf32>
    %279 = arith.addf %253, %278 : vector<16x32xf32>
    %c0_108 = arith.constant 0 : index
    %c0_109 = arith.constant 0 : index
    %280 = vector.load %arg16[%c0_108, %c0_109] : memref<1x32xf32, #tpu.memory_space<vmem>>, vector<1x32xf32>
    %c0_110 = arith.constant 0 : index
    %c0_111 = arith.constant 0 : index
    %281 = vector.load %arg17[%c0_110, %c0_111] : memref<1x32xf32, #tpu.memory_space<vmem>>, vector<1x32xf32>
    %cst_112 = arith.constant dense<0.000000e+00> : vector<16xf32>
    %282 = vector.multi_reduction <add>, %279, %cst_112 [1] : vector<16x32xf32> to vector<16xf32>
    %283 = vector.shape_cast %282 : vector<16xf32> to vector<16x1xf32>
    %cst_113 = arith.constant 3.200000e+01 : f32
    %284 = vector.broadcast %cst_113 : f32 to vector<16x1xf32>
    %285 = arith.divf %283, %284 : vector<16x1xf32>
    %286 = vector.broadcast %285 : vector<16x1xf32> to vector<16x32xf32>
    %287 = arith.subf %279, %286 : vector<16x32xf32>
    %288 = vector.broadcast %285 : vector<16x1xf32> to vector<16x32xf32>
    %289 = arith.subf %279, %288 : vector<16x32xf32>
    %290 = arith.mulf %287, %289 : vector<16x32xf32>
    %cst_114 = arith.constant dense<0.000000e+00> : vector<16xf32>
    %291 = vector.multi_reduction <add>, %290, %cst_114 [1] : vector<16x32xf32> to vector<16xf32>
    %292 = vector.shape_cast %291 : vector<16xf32> to vector<16x1xf32>
    %cst_115 = arith.constant 3.200000e+01 : f32
    %293 = vector.broadcast %cst_115 : f32 to vector<16x1xf32>
    %294 = arith.divf %292, %293 : vector<16x1xf32>
    %295 = vector.broadcast %285 : vector<16x1xf32> to vector<16x32xf32>
    %296 = arith.subf %279, %295 : vector<16x32xf32>
    %cst_116 = arith.constant 9.99999996E-13 : f32
    %297 = vector.broadcast %cst_116 : f32 to vector<16x1xf32>
    %298 = arith.addf %294, %297 : vector<16x1xf32>
    %299 = math.rsqrt %298 : vector<16x1xf32>
    %300 = vector.broadcast %299 : vector<16x1xf32> to vector<16x32xf32>
    %301 = arith.mulf %296, %300 : vector<16x32xf32>
    %302 = vector.broadcast %280 : vector<1x32xf32> to vector<16x32xf32>
    %303 = arith.mulf %301, %302 : vector<16x32xf32>
    %304 = vector.broadcast %281 : vector<1x32xf32> to vector<16x32xf32>
    %305 = arith.addf %303, %304 : vector<16x32xf32>
    %c0_117 = arith.constant 0 : index
    %c0_118 = arith.constant 0 : index
    %306 = vector.load %arg18[%c0_117, %c0_118] : memref<32x32xbf16, #tpu.memory_space<vmem>>, vector<32x32xbf16>
    %307 = arith.truncf %305 : vector<16x32xf32> to vector<16x32xbf16>
    %cst_119 = arith.constant dense<0.000000e+00> : vector<16x32xf32>
    %308 = tpu.matmul %307, %306, %cst_119 {dimension_numbers = #tpu.dot_dimension_numbers<[1], [0], [0], [1], [0, 0, 1, 1], [], []>} : vector<16x32xbf16>, vector<32x32xbf16>, vector<16x32xf32> -> vector<16x32xf32>
    %c0_120 = arith.constant 0 : index
    %c0_121 = arith.constant 0 : index
    %309 = vector.load %arg19[%c0_120, %c0_121] : memref<1x32xf32, #tpu.memory_space<vmem>>, vector<1x32xf32>
    %310 = vector.broadcast %309 : vector<1x32xf32> to vector<16x32xf32>
    %311 = arith.addf %308, %310 : vector<16x32xf32>
    %312 = math.tanh %311 : vector<16x32xf32>
    %c0_122 = arith.constant 0 : index
    %c0_123 = arith.constant 0 : index
    %313 = vector.load %arg20[%c0_122, %c0_123] : memref<32x128xbf16, #tpu.memory_space<vmem>>, vector<32x128xbf16>
    %314 = arith.truncf %312 : vector<16x32xf32> to vector<16x32xbf16>
    %cst_124 = arith.constant dense<0.000000e+00> : vector<16x128xf32>
    %315 = tpu.matmul %314, %313, %cst_124 {dimension_numbers = #tpu.dot_dimension_numbers<[1], [0], [0], [1], [0, 0, 1, 1], [], []>} : vector<16x32xbf16>, vector<32x128xbf16>, vector<16x128xf32> -> vector<16x128xf32>
    %c0_125 = arith.constant 0 : index
    %c0_126 = arith.constant 0 : index
    %316 = vector.load %arg21[%c0_125, %c0_126] : memref<1x128xf32, #tpu.memory_space<vmem>>, vector<1x128xf32>
    %317 = vector.broadcast %316 : vector<1x128xf32> to vector<16x128xf32>
    %318 = arith.addf %315, %317 : vector<16x128xf32>
    %c0_127 = arith.constant 0 : index
    %c0_128 = arith.constant 0 : index
    %319 = vector.load %arg22[%c0_127, %c0_128] : memref<16x128xf32, #tpu.memory_space<vmem>>, vector<16x128xf32>
    tpu.vector_store %arg22[%c0_127, %c0_128], %318 {strides = array<i32>} : memref<16x128xf32, #tpu.memory_space<vmem>>, vector<16x128xf32>,
    return
  }
}

</mosaic_0001>

<llo_original>
// kernel: tpu_custom_call.1
$region0: #{tpu_custom_call.1}
  #allocation0 [shape = 'u32[]', space=smem, size = 0x4, offset = 0x4, fixed_abs, tag = 'smem constant byte address 0x4 - core index']
  #allocation1 [shape = 'u32[72,128]{1,0:T(1,128)}', space=vmem, size = 0x9000, scoped, tag = 'internal scratch']
  %s0 = inlined_call_operand.vmem [shape: f32[16,16], index: 0, kind: input, shape index: {}]
  %s1 = inlined_call_operand.hbm [shape: f32[2,1,8], index: 1, kind: input, shape index: {}]
  %s2 = inlined_call_operand.hbm [shape: f32[1,16], index: 2, kind: input, shape index: {}]
  %s3 = inlined_call_operand.hbm [shape: f32[1,16], index: 3, kind: input, shape index: {}]
  %s4 = inlined_call_operand.hbm [shape: bf16[16,32], index: 4, kind: input, shape index: {}]
  %s5 = inlined_call_operand.hbm [shape: f32[1,32], index: 5, kind: input, shape index: {}]
  %s6 = inlined_call_operand.vmem [shape: bf16[32,96], index: 6, kind: input, shape index: {}]
  %s7 = inlined_call_operand.hbm [shape: f32[1,96], index: 7, kind: input, shape index: {}]
  %s8 = inlined_call_operand.vmem [shape: bf16[32,32], index: 8, kind: input, shape index: {}]
  %s9 = inlined_call_operand.hbm [shape: f32[1,32], index: 9, kind: input, shape index: {}]
  %s10 = inlined_call_operand.hbm [shape: f32[1,32], index: 10, kind: input, shape index: {}]
  %s11 = inlined_call_operand.hbm [shape: f32[1,32], index: 11, kind: input, shape index: {}]
  %s12 = inlined_call_operand.hbm [shape: bf16[32,64], index: 12, kind: input, shape index: {}]
  %s13 = inlined_call_operand.hbm [shape: f32[1,64], index: 13, kind: input, shape index: {}]
  %s14 = inlined_call_operand.vmem [shape: bf16[64,32], index: 14, kind: input, shape index: {}]
  %s15 = inlined_call_operand.hbm [shape: f32[1,32], index: 15, kind: input, shape index: {}]
  %s16 = inlined_call_operand.hbm [shape: f32[1,32], index: 16, kind: input, shape index: {}]
  %s17 = inlined_call_operand.hbm [shape: f32[1,32], index: 17, kind: input, shape index: {}]
  %s18 = inlined_call_operand.vmem [shape: bf16[32,32], index: 18, kind: input, shape index: {}]
  %s19 = inlined_call_operand.vmem [shape: f32[1,32], index: 19, kind: input, shape index: {}]
  %s20 = inlined_call_operand.hbm [shape: bf16[32,128], index: 20, kind: input, shape index: {}]
  %s21 = inlined_call_operand.vmem [shape: f32[1,128], index: 21, kind: input, shape index: {}]
  %s22 = inlined_call_operand.hbm [shape: f32[16,128], index: 22, kind: output, shape index: {}]
  %s23 = sld [smem:[#allocation0]]
  $region158: #{tpu_custom_call.1} parent=0
    _
  %s25 = ssub.s32 1, %s23
  %s26 = scalar_select 0, %s25, %s23
  $region1: #{tpu_custom_call.1} parent=0
    #allocation2 [shape = 'u8[1024]{0}', space=vmem, size = 0x400, scoped, tag = 'input window, operand 1, single buffered']
    #allocation3 [shape = 's32[1]{0}', space=sflag, size = 0x4, scoped, tag = 'scoped memory for tpu_custom_call.1']
    #allocation4 [shape = 's32[1]{0}', space=sflag, size = 0x4, scoped, tag = 'scoped memory for tpu_custom_call.1']
    #allocation5 [shape = 'u8[512]{0}', space=vmem, size = 0x400, scoped, tag = 'input window, operand 2, single buffered']
    #allocation6 [shape = 's32[1]{0}', space=sflag, size = 0x4, scoped, tag = 'scoped memory for tpu_custom_call.1']
    #allocation7 [shape = 'u8[512]{0}', space=vmem, size = 0x400, scoped, tag = 'input window, operand 3, single buffered']
    #allocation8 [shape = 'u8[4096]{0}', space=vmem, size = 0x1000, scoped, tag = 'input window, operand 4, single buffered']
    #allocation9 [shape = 's32[1]{0}', space=sflag, size = 0x4, scoped, tag = 'scoped memory for tpu_custom_call.1']
    #allocation10 [shape = 'u8[512]{0}', space=vmem, size = 0x400, scoped, tag = 'input window, operand 5, single buffered']
    #allocation11 [shape = 'u8[512]{0}', space=vmem, size = 0x400, scoped, tag = 'input window, operand 7, single buffered']
    #allocation12 [shape = 's32[1]{0}', space=sflag, size = 0x4, scoped, tag = 'scoped memory for tpu_custom_call.1']
    #allocation13 [shape = 'u8[512]{0}', space=vmem, size = 0x400, scoped, tag = 'input window, operand 9, single buffered']
    #allocation14 [shape = 'u8[512]{0}', space=vmem, size = 0x400, scoped, tag = 'input window, operand 10, single buffered']
    #allocation15 [shape = 's32[1]{0}', space=sflag, size = 0x4, scoped, tag = 'scoped memory for tpu_custom_call.1']
    #allocation16 [shape = 'u8[512]{0}', space=vmem, size = 0x400, scoped, tag = 'input window, operand 11, single buffered']
    #allocation17 [shape = 'u8[8192]{0}', space=vmem, size = 0x2000, scoped, tag = 'input window, operand 12, single buffered']
    #allocation18 [shape = 's32[1]{0}', space=sflag, size = 0x4, scoped, tag = 'scoped memory for tpu_custom_call.1']
    #allocation19 [shape = 'u8[512]{0}', space=vmem, size = 0x400, scoped, tag = 'input window, operand 13, single buffered']
    #allocation20 [shape = 'u8[512]{0}', space=vmem, size = 0x400, scoped, tag = 'input window, operand 15, single buffered']
    #allocation21 [shape = 's32[1]{0}', space=sflag, size = 0x4, scoped, tag = 'scoped memory for tpu_custom_call.1']
    #allocation22 [shape = 'u8[512]{0}', space=vmem, size = 0x400, scoped, tag = 'input window, operand 16, single buffered']
    #allocation23 [shape = 'u8[512]{0}', space=vmem, size = 0x400, scoped, tag = 'input window, operand 17, single buffered']
    #allocation24 [shape = 's32[1]{0}', space=sflag, size = 0x4, scoped, tag = 'scoped memory for tpu_custom_call.1']
    #allocation25 [shape = 'u8[8192]{0}', space=vmem, size = 0x2000, scoped, tag = 'input window, operand 20, single buffered']
    #allocation26 [shape = 'u8[8192]{0}', space=vmem, size = 0x2000, scoped, tag = 'output window, operand 0, single buffered']
    %27 = vsyncpa [#allocation3], 0
    %28 = vsyncpa [#allocation6], 0
    %29 = vsyncpa [#allocation9], 0
    %30 = vsyncpa [#allocation12], 0
    %31 = vsyncpa [#allocation15], 0
    %32 = vsyncpa [#allocation18], 0
    %33 = vsyncpa [#allocation21], 0
    %34 = vsyncpa [#allocation24], 0
    %35 = vsyncpa [#allocation4], 0
    // Predicated region
    $region2: #{tpu_custom_call.1} parent=1 // pred_check
      _
    $region3: #{tpu_custom_call.1} parent=1 // pred_check_branch
      %37 = sbr.rel (0) target = $region5
    $region4: #{tpu_custom_call.1} parent=1 // pred_region
      _
    $region5: #{tpu_custom_call.1} parent=1 // pred_fallthru
      _
    // Predicated region
    $region6: #{tpu_custom_call.1} parent=1 // pred_check
      _
    $region7: #{tpu_custom_call.1} parent=1 // pred_check_branch
      %39 = sbr.rel (0) target = $region9
    $region8: #{tpu_custom_call.1} parent=1 // pred_region
      %41 = vsyncadd [#allocation3], 0
      %s42 = sshll.u32 %s1, 4
      %s43 = int_to_ptr.hbm [resolvable:$true] %s42
      %s44 = sshll.u32 [#allocation2], 4
      %s45 = int_to_ptr.vmem [resolvable:$true] %s44
      %50 = dma.hbm_to_vmem [thread:$0]  %s43, 32, %s45, [#allocation3], 16, 16, 1
    $region9: #{tpu_custom_call.1} parent=1 // pred_fallthru
      _
    // Predicated region
    $region10: #{tpu_custom_call.1} parent=1 // pred_check
      _
    $region11: #{tpu_custom_call.1} parent=1 // pred_check_branch
      %52 = sbr.rel (0) target = $region13
    $region12: #{tpu_custom_call.1} parent=1 // pred_region
      %54 = vsyncadd [#allocation6], 0
      %s56 = sshll.u32 %s2, 4
      %s57 = int_to_ptr.hbm [resolvable:$true] %s56
      %s58 = sshll.u32 [#allocation5], 4
      %s59 = int_to_ptr.vmem [resolvable:$true] %s58
      %61 = dma.hbm_to_vmem [thread:$0]  %s57, 16, %s59, [#allocation6]
    $region13: #{tpu_custom_call.1} parent=1 // pred_fallthru
      _
    // Predicated region
    $region14: #{tpu_custom_call.1} parent=1 // pred_check
      _
    $region15: #{tpu_custom_call.1} parent=1 // pred_check_branch
      %63 = sbr.rel (0) target = $region17
    $region16: #{tpu_custom_call.1} parent=1 // pred_region
      %65 = vsyncadd [#allocation6], 0
      %s67 = sshll.u32 %s3, 4
      %s68 = int_to_ptr.hbm [resolvable:$true] %s67
      %s69 = sshll.u32 [#allocation7], 4
      %s70 = int_to_ptr.vmem [resolvable:$true] %s69
      %72 = dma.hbm_to_vmem [thread:$0]  %s68, 16, %s70, [#allocation6]
    $region17: #{tpu_custom_call.1} parent=1 // pred_fallthru
      _
    // Predicated region
    $region18: #{tpu_custom_call.1} parent=1 // pred_check
      _
    $region19: #{tpu_custom_call.1} parent=1 // pred_check_branch
      %74 = sbr.rel (0) target = $region21
    $region20: #{tpu_custom_call.1} parent=1 // pred_region
      %76 = vsyncadd [#allocation9], 0
      %s77 = sshll.u32 %s4, 4
      %s78 = int_to_ptr.hbm [resolvable:$true] %s77
      %s79 = sshll.u32 [#allocation8], 4
      %s80 = int_to_ptr.vmem [resolvable:$true] %s79
      %85 = dma.hbm_to_vmem [thread:$0]  %s78, 128, %s80, [#allocation9], 64, 64, 4
    $region21: #{tpu_custom_call.1} parent=1 // pred_fallthru
      _
    // Predicated region
    $region22: #{tpu_custom_call.1} parent=1 // pred_check
      _
    $region23: #{tpu_custom_call.1} parent=1 // pred_check_branch
      %87 = sbr.rel (0) target = $region25
    $region24: #{tpu_custom_call.1} parent=1 // pred_region
      %89 = vsyncadd [#allocation9], 0
      %s91 = sshll.u32 %s5, 4
      %s92 = int_to_ptr.hbm [resolvable:$true] %s91
      %s93 = sshll.u32 [#allocation10], 4
      %s94 = int_to_ptr.vmem [resolvable:$true] %s93
      %96 = dma.hbm_to_vmem [thread:$0]  %s92, 16, %s94, [#allocation9]
    $region25: #{tpu_custom_call.1} parent=1 // pred_fallthru
      _
    // Predicated region
    $region26: #{tpu_custom_call.1} parent=1 // pred_check
      _
    $region27: #{tpu_custom_call.1} parent=1 // pred_check_branch
      %98 = sbr.rel (0) target = $region29
    $region28: #{tpu_custom_call.1} parent=1 // pred_region
      _
    $region29: #{tpu_custom_call.1} parent=1 // pred_fallthru
      _
    // Predicated region
    $region30: #{tpu_custom_call.1} parent=1 // pred_check
      _
    $region31: #{tpu_custom_call.1} parent=1 // pred_check_branch
      %100 = sbr.rel (0) target = $region33
    $region32: #{tpu_custom_call.1} parent=1 // pred_region
      %102 = vsyncadd [#allocation12], 0
      %s104 = sshll.u32 %s7, 4
      %s105 = int_to_ptr.hbm [resolvable:$true] %s104
      %s106 = sshll.u32 [#allocation11], 4
      %s107 = int_to_ptr.vmem [resolvable:$true] %s106
      %109 = dma.hbm_to_vmem [thread:$0]  %s105, 16, %s107, [#allocation12]
    $region33: #{tpu_custom_call.1} parent=1 // pred_fallthru
      _
    // Predicated region
    $region34: #{tpu_custom_call.1} parent=1 // pred_check
      _
    $region35: #{tpu_custom_call.1} parent=1 // pred_check_branch
      %111 = sbr.rel (0) target = $region37
    $region36: #{tpu_custom_call.1} parent=1 // pred_region
      _
    $region37: #{tpu_custom_call.1} parent=1 // pred_fallthru
      _
    // Predicated region
    $region38: #{tpu_custom_call.1} parent=1 // pred_check
      _
    $region39: #{tpu_custom_call.1} parent=1 // pred_check_branch
      %113 = sbr.rel (0) target = $region41
    $region40: #{tpu_custom_call.1} parent=1 // pred_region
      %115 = vsyncadd [#allocation12], 0
      %s117 = sshll.u32 %s9, 4
      %s118 = int_to_ptr.hbm [resolvable:$true] %s117
      %s119 = sshll.u32 [#allocation13], 4
      %s120 = int_to_ptr.vmem [resolvable:$true] %s119
      %122 = dma.hbm_to_vmem [thread:$0]  %s118, 16, %s120, [#allocation12]
    $region41: #{tpu_custom_call.1} parent=1 // pred_fallthru
      _
    // Predicated region
    $region42: #{tpu_custom_call.1} parent=1 // pred_check
      _
    $region43: #{tpu_custom_call.1} parent=1 // pred_check_branch
      %124 = sbr.rel (0) target = $region45
    $region44: #{tpu_custom_call.1} parent=1 // pred_region
      %126 = vsyncadd [#allocation15], 0
      %s128 = sshll.u32 %s10, 4
      %s129 = int_to_ptr.hbm [resolvable:$true] %s128
      %s130 = sshll.u32 [#allocation14], 4
      %s131 = int_to_ptr.vmem [resolvable:$true] %s130
      %133 = dma.hbm_to_vmem [thread:$0]  %s129, 16, %s131, [#allocation15]
    $region45: #{tpu_custom_call.1} parent=1 // pred_fallthru
      _
    // Predicated region
    $region46: #{tpu_custom_call.1} parent=1 // pred_check
      _
    $region47: #{tpu_custom_call.1} parent=1 // pred_check_branch
      %135 = sbr.rel (0) target = $region49
    $region48: #{tpu_custom_call.1} parent=1 // pred_region
      %137 = vsyncadd [#allocation15], 0
      %s139 = sshll.u32 %s11, 4
      %s140 = int_to_ptr.hbm [resolvable:$true] %s139
      %s141 = sshll.u32 [#allocation16], 4
      %s142 = int_to_ptr.vmem [resolvable:$true] %s141
      %144 = dma.hbm_to_vmem [thread:$0]  %s140, 16, %s142, [#allocation15]
    $region49: #{tpu_custom_call.1} parent=1 // pred_fallthru
      _
    // Predicated region
    $region50: #{tpu_custom_call.1} parent=1 // pred_check
      _
    $region51: #{tpu_custom_call.1} parent=1 // pred_check_branch
      %146 = sbr.rel (0) target = $region53
    $region52: #{tpu_custom_call.1} parent=1 // pred_region
      %148 = vsyncadd [#allocation18], 0
      %s149 = sshll.u32 %s12, 4
      %s150 = int_to_ptr.hbm [resolvable:$true] %s149
      %s151 = sshll.u32 [#allocation17], 4
      %s152 = int_to_ptr.vmem [resolvable:$true] %s151
      %157 = dma.hbm_to_vmem [thread:$0]  %s150, 256, %s152, [#allocation18], 64, 64, 4
    $region53: #{tpu_custom_call.1} parent=1 // pred_fallthru
      _
    // Predicated region
    $region54: #{tpu_custom_call.1} parent=1 // pred_check
      _
    $region55: #{tpu_custom_call.1} parent=1 // pred_check_branch
      %159 = sbr.rel (0) target = $region57
    $region56: #{tpu_custom_call.1} parent=1 // pred_region
      %161 = vsyncadd [#allocation18], 0
      %s163 = sshll.u32 %s13, 4
      %s164 = int_to_ptr.hbm [resolvable:$true] %s163
      %s165 = sshll.u32 [#allocation19], 4
      %s166 = int_to_ptr.vmem [resolvable:$true] %s165
      %168 = dma.hbm_to_vmem [thread:$0]  %s164, 16, %s166, [#allocation18]
    $region57: #{tpu_custom_call.1} parent=1 // pred_fallthru
      _
    // Predicated region
    $region58: #{tpu_custom_call.1} parent=1 // pred_check
      _
    $region59: #{tpu_custom_call.1} parent=1 // pred_check_branch
      %170 = sbr.rel (0) target = $region61
    $region60: #{tpu_custom_call.1} parent=1 // pred_region
      _
    $region61: #{tpu_custom_call.1} parent=1 // pred_fallthru
      _
    // Predicated region
    $region62: #{tpu_custom_call.1} parent=1 // pred_check
      _
    $region63: #{tpu_custom_call.1} parent=1 // pred_check_branch
      %172 = sbr.rel (0) target = $region65
    $region64: #{tpu_custom_call.1} parent=1 // pred_region
      %174 = vsyncadd [#allocation21], 0
      %s176 = sshll.u32 %s15, 4
      %s177 = int_to_ptr.hbm [resolvable:$true] %s176
      %s178 = sshll.u32 [#allocation20], 4
      %s179 = int_to_ptr.vmem [resolvable:$true] %s178
      %181 = dma.hbm_to_vmem [thread:$0]  %s177, 16, %s179, [#allocation21]
    $region65: #{tpu_custom_call.1} parent=1 // pred_fallthru
      _
    // Predicated region
    $region66: #{tpu_custom_call.1} parent=1 // pred_check
      _
    $region67: #{tpu_custom_call.1} parent=1 // pred_check_branch
      %183 = sbr.rel (0) target = $region69
    $region68: #{tpu_custom_call.1} parent=1 // pred_region
      %185 = vsyncadd [#allocation21], 0
      %s187 = sshll.u32 %s16, 4
      %s188 = int_to_ptr.hbm [resolvable:$true] %s187
      %s189 = sshll.u32 [#allocation22], 4
      %s190 = int_to_ptr.vmem [resolvable:$true] %s189
      %192 = dma.hbm_to_vmem [thread:$0]  %s188, 16, %s190, [#allocation21]
    $region69: #{tpu_custom_call.1} parent=1 // pred_fallthru
      _
    // Predicated region
    $region70: #{tpu_custom_call.1} parent=1 // pred_check
      _
    $region71: #{tpu_custom_call.1} parent=1 // pred_check_branch
      %194 = sbr.rel (0) target = $region73
    $region72: #{tpu_custom_call.1} parent=1 // pred_region
      %196 = vsyncadd [#allocation24], 0
      %s198 = sshll.u32 %s17, 4
      %s199 = int_to_ptr.hbm [resolvable:$true] %s198
      %s200 = sshll.u32 [#allocation23], 4
      %s201 = int_to_ptr.vmem [resolvable:$true] %s200
      %203 = dma.hbm_to_vmem [thread:$0]  %s199, 16, %s201, [#allocation24]
    $region73: #{tpu_custom_call.1} parent=1 // pred_fallthru
      _
    // Predicated region
    $region74: #{tpu_custom_call.1} parent=1 // pred_check
      _
    $region75: #{tpu_custom_call.1} parent=1 // pred_check_branch
      %205 = sbr.rel (0) target = $region77
    $region76: #{tpu_custom_call.1} parent=1 // pred_region
      _
    $region77: #{tpu_custom_call.1} parent=1 // pred_fallthru
      _
    // Predicated region
    $region78: #{tpu_custom_call.1} parent=1 // pred_check
      _
    $region79: #{tpu_custom_call.1} parent=1 // pred_check_branch
      %207 = sbr.rel (0) target = $region81
    $region80: #{tpu_custom_call.1} parent=1 // pred_region
      _
    $region81: #{tpu_custom_call.1} parent=1 // pred_fallthru
      _
    // Predicated region
    $region82: #{tpu_custom_call.1} parent=1 // pred_check
      _
    $region83: #{tpu_custom_call.1} parent=1 // pred_check_branch
      %209 = sbr.rel (0) target = $region85
    $region84: #{tpu_custom_call.1} parent=1 // pred_region
      %211 = vsyncadd [#allocation24], 0
      %s212 = sshll.u32 %s20, 4
      %s213 = int_to_ptr.hbm [resolvable:$true] %s212
      %s214 = sshll.u32 [#allocation25], 4
      %s215 = int_to_ptr.vmem [resolvable:$true] %s214
      %220 = dma.hbm_to_vmem [thread:$0]  %s213, 256, %s215, [#allocation24], 64, 64, 4
    $region85: #{tpu_custom_call.1} parent=1 // pred_fallthru
      _
    // Predicated region
    $region86: #{tpu_custom_call.1} parent=1 // pred_check
      _
    $region87: #{tpu_custom_call.1} parent=1 // pred_check_branch
      %222 = sbr.rel (0) target = $region89
    $region88: #{tpu_custom_call.1} parent=1 // pred_region
      _
    $region89: #{tpu_custom_call.1} parent=1 // pred_fallthru
      _
    // Predicated region
    $region90: #{tpu_custom_call.1} parent=1 // pred_check
      _
    $region91: #{tpu_custom_call.1} parent=1 // pred_check_branch
      %224 = sbr.rel (0) target = $region93
    $region92: #{tpu_custom_call.1} parent=1 // pred_region
      %226 = dma.done [#allocation3], 32
    $region93: #{tpu_custom_call.1} parent=1 // pred_fallthru
      _
    // Predicated region
    $region94: #{tpu_custom_call.1} parent=1 // pred_check
      _
    $region95: #{tpu_custom_call.1} parent=1 // pred_check_branch
      %228 = sbr.rel (0) target = $region97
    $region96: #{tpu_custom_call.1} parent=1 // pred_region
      %230 = dma.done [#allocation6], 16
    $region97: #{tpu_custom_call.1} parent=1 // pred_fallthru
      _
    // Predicated region
    $region98: #{tpu_custom_call.1} parent=1 // pred_check
      _
    $region99: #{tpu_custom_call.1} parent=1 // pred_check_branch
      %232 = sbr.rel (0) target = $region101
    $region100: #{tpu_custom_call.1} parent=1 // pred_region
      %234 = dma.done [#allocation6], 16
    $region101: #{tpu_custom_call.1} parent=1 // pred_fallthru
      _
    // Predicated region
    $region102: #{tpu_custom_call.1} parent=1 // pred_check
      _
    $region103: #{tpu_custom_call.1} parent=1 // pred_check_branch
      %236 = sbr.rel (0) target = $region105
    $region104: #{tpu_custom_call.1} parent=1 // pred_region
      %238 = dma.done [#allocation9], 128
    $region105: #{tpu_custom_call.1} parent=1 // pred_fallthru
      _
    // Predicated region
    $region106: #{tpu_custom_call.1} parent=1 // pred_check
      _
    $region107: #{tpu_custom_call.1} parent=1 // pred_check_branch
      %240 = sbr.rel (0) target = $region109
    $region108: #{tpu_custom_call.1} parent=1 // pred_region
      %242 = dma.done [#allocation9], 16
    $region109: #{tpu_custom_call.1} parent=1 // pred_fallthru
      _
    // Predicated region
    $region110: #{tpu_custom_call.1} parent=1 // pred_check
      _
    $region111: #{tpu_custom_call.1} parent=1 // pred_check_branch
      %244 = sbr.rel (0) target = $region113
    $region112: #{tpu_custom_call.1} parent=1 // pred_region
      %246 = dma.done [#allocation12], 16
    $region113: #{tpu_custom_call.1} parent=1 // pred_fallthru
      _
    // Predicated region
    $region114: #{tpu_custom_call.1} parent=1 // pred_check
      _
    $region115: #{tpu_custom_call.1} parent=1 // pred_check_branch
      %248 = sbr.rel (0) target = $region117
    $region116: #{tpu_custom_call.1} parent=1 // pred_region
      %250 = dma.done [#allocation12], 16
    $region117: #{tpu_custom_call.1} parent=1 // pred_fallthru
      _
    // Predicated region
    $region118: #{tpu_custom_call.1} parent=1 // pred_check
      _
    $region119: #{tpu_custom_call.1} parent=1 // pred_check_branch
      %252 = sbr.rel (0) target = $region121
    $region120: #{tpu_custom_call.1} parent=1 // pred_region
      %254 = dma.done [#allocation15], 16
    $region121: #{tpu_custom_call.1} parent=1 // pred_fallthru
      _
    // Predicated region
    $region122: #{tpu_custom_call.1} parent=1 // pred_check
      _
    $region123: #{tpu_custom_call.1} parent=1 // pred_check_branch
      %256 = sbr.rel (0) target = $region125
    $region124: #{tpu_custom_call.1} parent=1 // pred_region
      %258 = dma.done [#allocation15], 16
    $region125: #{tpu_custom_call.1} parent=1 // pred_fallthru
      _
    // Predicated region
    $region126: #{tpu_custom_call.1} parent=1 // pred_check
      _
    $region127: #{tpu_custom_call.1} parent=1 // pred_check_branch
      %260 = sbr.rel (0) target = $region129
    $region128: #{tpu_custom_call.1} parent=1 // pred_region
      %262 = dma.done [#allocation18], 256
    $region129: #{tpu_custom_call.1} parent=1 // pred_fallthru
      _
    // Predicated region
    $region130: #{tpu_custom_call.1} parent=1 // pred_check
      _
    $region131: #{tpu_custom_call.1} parent=1 // pred_check_branch
      %264 = sbr.rel (0) target = $region133
    $region132: #{tpu_custom_call.1} parent=1 // pred_region
      %266 = dma.done [#allocation18], 16
    $region133: #{tpu_custom_call.1} parent=1 // pred_fallthru
      _
    // Predicated region
    $region134: #{tpu_custom_call.1} parent=1 // pred_check
      _
    $region135: #{tpu_custom_call.1} parent=1 // pred_check_branch
      %268 = sbr.rel (0) target = $region137
    $region136: #{tpu_custom_call.1} parent=1 // pred_region
      %270 = dma.done [#allocation21], 16
    $region137: #{tpu_custom_call.1} parent=1 // pred_fallthru
      _
    // Predicated region
    $region138: #{tpu_custom_call.1} parent=1 // pred_check
      _
    $region139: #{tpu_custom_call.1} parent=1 // pred_check_branch
      %272 = sbr.rel (0) target = $region141
    $region140: #{tpu_custom_call.1} parent=1 // pred_region
      %274 = dma.done [#allocation21], 16
    $region141: #{tpu_custom_call.1} parent=1 // pred_fallthru
      _
    // Predicated region
    $region142: #{tpu_custom_call.1} parent=1 // pred_check
      _
    $region143: #{tpu_custom_call.1} parent=1 // pred_check_branch
      %276 = sbr.rel (0) target = $region145
    $region144: #{tpu_custom_call.1} parent=1 // pred_region
      %278 = dma.done [#allocation24], 16
    $region145: #{tpu_custom_call.1} parent=1 // pred_fallthru
      _
    // Predicated region
    $region146: #{tpu_custom_call.1} parent=1 // pred_check
      _
    $region147: #{tpu_custom_call.1} parent=1 // pred_check_branch
      %280 = sbr.rel (0) target = $region149
    $region148: #{tpu_custom_call.1} parent=1 // pred_region
      %282 = dma.done [#allocation24], 256
    $region149: #{tpu_custom_call.1} parent=1 // pred_fallthru
      _
    %v284 = vld [vmem:[%s0] sm:$0xff]
    %v285 = vld [vmem:[%s0 + $0x8] sm:$0xff]
    %v286 = vld [vmem:[#allocation5] sm:$0x1]
    %v287 = vld [vmem:[#allocation7] sm:$0x1]
    %vm288 = vcmask 130048
    %v289 = vsel %vm288, %v284, 0.0
    %290 = vadd.xlane.f32.xlu0 %v289
    %v291 = vpop.xlane.xlu0 %290
    %v292 = vsel %vm288, %v285, 0.0
    %293 = vadd.xlane.f32.xlu0 %v292
    %v294 = vpop.xlane.xlu0 %293
    %v295 = vrcp.pop 16.0
    %v296 = vmul.f32 16.0, %v295
    %v297 = vsub.f32 1.0, %v296
    %v298 = vmul.f32 %v295, %v297
    %v299 = vadd.f32 %v295, %v298
    %vm300 = vweird.f32 %v295
    %v301 = vsel %vm300, %v295, %v299
    %v302 = vmul.f32 %v291, %v301
    %v303 = vmul.f32 %v294, %v301
    %v304 = vsub.f32 %v284, %v302
    %v305 = vsub.f32 %v285, %v303
    %v306 = vmul.f32 %v304, %v304
    %v307 = vmul.f32 %v305, %v305
    %v308 = vsel %vm288, %v306, 0.0
    %309 = vadd.xlane.f32.xlu0 %v308
    %v310 = vpop.xlane.xlu0 %309
    %v311 = vsel %vm288, %v307, 0.0
    %312 = vadd.xlane.f32.xlu0 %v311
    %v313 = vpop.xlane.xlu0 %312
    %v314 = vmul.f32 %v310, %v301
    %v315 = vmul.f32 %v313, %v301
    %v316 = vadd.f32 %v314, 1e-12
    %v317 = vadd.f32 %v315, 1e-12
    %v318 = vrsqrt.pop %v316
    %v319 = vmul.f32 %v318, %v316
    %v320 = vmul.f32 %v319, %v318
    %v321 = vmul.f32 0.5, %v320
    %v322 = vsub.f32 1.5, %v321
    %v323 = vmul.f32 %v318, %v322
    %vm324 = vweird.f32 %v316
    %vm325 = vweird.f32 %v318
    %vm326 = vmor %vm324, %vm325
    %v327 = vsel %vm326, %v318, %v323
    %v328 = vrsqrt.pop %v317
    %v329 = vmul.f32 %v328, %v317
    %v330 = vmul.f32 %v329, %v328
    %v331 = vmul.f32 0.5, %v330
    %v332 = vsub.f32 1.5, %v331
    %v333 = vmul.f32 %v328, %v332
    %vm334 = vweird.f32 %v317
    %vm335 = vweird.f32 %v328
    %vm336 = vmor %vm334, %vm335
    %v337 = vsel %vm336, %v328, %v333
    %v338 = vmul.f32 %v304, %v327
    %v339 = vmul.f32 %v305, %v337
    %v341 = vperm.slane %v286, 0
    %v343 = vmul.f32 %v338, %v341
    %v344 = vmul.f32 %v339, %v341
    %v346 = vperm.slane %v287, 0
    %v348 = vadd.f32 %v343, %v346
    %v349 = vadd.f32 %v344, %v346
    %v350 = vld [vmem:[#allocation2] sm:$0x1]
    %v351 = vld [vmem:[#allocation2 + $0x1] sm:$0x1]
    %v352 = vld [vmem:[#allocation8] sm:$0xf]
    %v353 = vld [vmem:[#allocation8 + $0x4] sm:$0xf]
    %v354 = vpack.c.bf16 %v349, %v348
    %v355 = vld [vmem:[#allocation10] sm:$0x1]
    %v357 = vperm.slane %v355, 0
    %v361 = vunpack.c.l.b16 %v352
    %v362 = vunpack.c.l.b16 %v353
    %v363 = vpack.c.b16 %v362, %v361
    %v366 = vsel %vm288, %v354, 0
    %368 = vmatpush.bf16.msra.mxu0 0
    %369 = vmatpush.bf16.msra.mxu0 0
    %370 = vmatpush.bf16.msra.mxu0 0
    %371 = vmatpush.bf16.msra.mxu0 0
    %372 = vmatpush.bf16.msra.mxu0 0
    %373 = vmatpush.bf16.msra.mxu0 0
    %374 = vmatpush.bf16.msra.mxu0 0
    %375 = vmatpush.bf16.msra.mxu0 %v363
    %376 = vmatmul.bf16.gmra.mxu0 %v366
    %v377 = vpop.f32.mrf.mxu0
    %v378 = vadd.f32 %v357, %v377
    %v379 = vpop.f32.mrf.mxu0
    %v380 = vadd.f32 %v357, %v379
    %381 = vdwg.mxu0
    %v382 = vld [vmem:[%s6] sm:$0xf]
    %v383 = vld [vmem:[%s6 + $0x4] sm:$0xf]
    %v384 = vld [vmem:[%s6 + $0x8] sm:$0xf]
    %v385 = vld [vmem:[%s6 + $0xc] sm:$0xf]
    %v386 = vpack.c.bf16 %v380, %v378
    %v387 = vld [vmem:[#allocation11] sm:$0x1]
    %v389 = vperm.slane %v387, 0
    %v395 = vunpack.c.l.b16 %v382
    %v396 = vunpack.c.l.b16 %v383
    %v397 = vunpack.c.l.b16 %v384
    %v398 = vunpack.c.l.b16 %v385
    %v399 = vpack.c.b16 %v396, %v395
    %v400 = vpack.c.b16 %v398, %v397
    %vm403 = vcmask 261120
    %v405 = vsel %vm403, %v386, 0
    %407 = vmatpush.bf16.msra.mxu0 0
    %408 = vmatpush.bf16.msra.mxu0 0
    %409 = vmatpush.bf16.msra.mxu0 0
    %410 = vmatpush.bf16.msra.mxu0 0
    %411 = vmatpush.bf16.msra.mxu0 0
    %412 = vmatpush.bf16.msra.mxu0 0
    %413 = vmatpush.bf16.msra.mxu0 %v400
    %414 = vmatpush.bf16.msra.mxu0 %v399
    %415 = vmatmul.bf16.gmra.mxu0 %v405
    %v416 = vpop.f32.mrf.mxu0
    %v417 = vadd.f32 %v389, %v416
    %v418 = vpop.f32.mrf.mxu0
    %v419 = vadd.f32 %v389, %v418
    %420 = vdwg.mxu0
    %v421 = vpack.c.bf16 %v417, %v417
    %v422 = vpack.c.bf16 %v419, %v419
    %v425 = vperm.slane %v350, 0
    %v426 = vperm.slane %v351, 0
    %v430 = vunpack.c.l.b16 %v421
    %v431 = vpack.c.b16 %v430, %v430
    %432 = vrot.lane.b32.xlu0 %v431, 96
    %v433 = vpop.permute.xlu0 %432
    %v435 = vsel %vm288, %v421, 0
    %v438 = vsel %vm288, %v433, 0
    %440 = vmatpush.bf16.xpose.msra.mxu0 0
    %441 = vmatpush.bf16.xpose.msra.mxu0 0
    %442 = vmatpush.bf16.xpose.msra.mxu0 0
    %443 = vmatpush.bf16.xpose.msra.mxu0 0
    %444 = vmatpush.bf16.xpose.msra.mxu0 0
    %445 = vmatpush.bf16.xpose.msra.mxu0 0
    %446 = vmatpush.bf16.xpose.msra.mxu0 0
    %447 = vmatpush.bf16.xpose.msra.mxu0 %v438
    %448 = vmatmul.bf16.gmra.mxu0 %v435
    %v449 = vpop.f32.mrf.mxu0
    %v450 = vadd.f32 %v425, %v449
    %v451 = vpop.f32.mrf.mxu0
    %452 = vdwg.mxu0
    %v454 = vunpack.c.l.b16 %v422
    %v455 = vpack.c.b16 %v454, %v454
    %456 = vrot.lane.b32.xlu0 %v455, 96
    %v457 = vpop.permute.xlu0 %456
    %v459 = vsel %vm288, %v422, 0
    %v462 = vsel %vm288, %v457, 0
    %464 = vmatpush.bf16.xpose.msra.mxu0 0
    %465 = vmatpush.bf16.xpose.msra.mxu0 0
    %466 = vmatpush.bf16.xpose.msra.mxu0 0
    %467 = vmatpush.bf16.xpose.msra.mxu0 0
    %468 = vmatpush.bf16.xpose.msra.mxu0 0
    %469 = vmatpush.bf16.xpose.msra.mxu0 0
    %470 = vmatpush.bf16.xpose.msra.mxu0 0
    %471 = vmatpush.bf16.xpose.msra.mxu0 %v462
    %472 = vmatmul.bf16.gmra.mxu0 %v459
    %v473 = vpop.f32.mrf.mxu0
    %v474 = vadd.f32 %v426, %v473
    %v475 = vpop.f32.mrf.mxu0
    %476 = vdwg.mxu0
    %vm477 = vcmask 64512
    %v478 = vsel %vm477, %v450, -inf
    %479 = vmax.xlane.f32.xlu0 %v478
    %v480 = vpop.xlane.xlu0 %479
    %v481 = vsel %vm477, %v474, -inf
    %482 = vmax.xlane.f32.xlu0 %v481
    %v483 = vpop.xlane.xlu0 %482
    %v484 = vsub.f32 %v450, %v480
    %v485 = vsub.f32 %v474, %v483
    %v486 = vmul.f32 %v484, 1.442695
    %v487 = vpow.pop %v486
    %v488 = vmul.f32 %v485, 1.442695
    %v489 = vpow.pop %v488
    %v490 = vsel %vm477, %v487, 0.0
    %491 = vadd.xlane.f32.xlu0 %v490
    %v492 = vpop.xlane.xlu0 %491
    %v493 = vsel %vm477, %v489, 0.0
    %494 = vadd.xlane.f32.xlu0 %v493
    %v495 = vpop.xlane.xlu0 %494
    %v496 = vrcp.pop %v492
    %v497 = vrcp.pop %v495
    %v498 = vmul.f32 %v487, %v496
    %v499 = vmul.f32 %v489, %v497
    %v500 = vpack.c.bf16 %v498, %v498
    %v501 = vpack.c.bf16 %v499, %v499
    %502 = vrot.lane.b32.xlu0 %v431, 64
    %v503 = vpop.permute.xlu0 %502
    %v505 = vsel %vm477, %v500, 0
    %vm507 = vcmask 1043456
    %v509 = vsel %vm507, %v503, 0
    %511 = vmatpush.bf16.msra.mxu0 0
    %512 = vmatpush.bf16.msra.mxu0 0
    %513 = vmatpush.bf16.msra.mxu0 0
    %514 = vmatpush.bf16.msra.mxu0 0
    %515 = vmatpush.bf16.msra.mxu0 0
    %516 = vmatpush.bf16.msra.mxu0 0
    %517 = vmatpush.bf16.msra.mxu0 0
    %518 = vmatpush.bf16.msra.mxu0 %v509
    %519 = vmatmul.bf16.gmra.mxu0 %v505
    %v520 = vpop.f32.mrf.mxu0
    %v521 = vadd.f32 0.0, %v520
    %v522 = vpop.f32.mrf.mxu0
    %523 = vdwg.mxu0
    %524 = vrot.lane.b32.xlu0 %v455, 64
    %v525 = vpop.permute.xlu0 %524
    %v527 = vsel %vm477, %v501, 0
    %v530 = vsel %vm507, %v525, 0
    %532 = vmatpush.bf16.msra.mxu0 0
    %533 = vmatpush.bf16.msra.mxu0 0
    %534 = vmatpush.bf16.msra.mxu0 0
    %535 = vmatpush.bf16.msra.mxu0 0
    %536 = vmatpush.bf16.msra.mxu0 0
    %537 = vmatpush.bf16.msra.mxu0 0
    %538 = vmatpush.bf16.msra.mxu0 0
    %539 = vmatpush.bf16.msra.mxu0 %v530
    %540 = vmatmul.bf16.gmra.mxu0 %v527
    %v541 = vpop.f32.mrf.mxu0
    %v542 = vadd.f32 0.0, %v541
    %v543 = vpop.f32.mrf.mxu0
    %544 = vdwg.mxu0
    %545 = vrot.lane.b32.xlu0 %v431, 112
    %v546 = vpop.permute.xlu0 %545
    %547 = vrot.lane.b32.xlu0 %v431, 80
    %v548 = vpop.permute.xlu0 %547
    %v550 = vsel %vm288, %v546, 0
    %v553 = vsel %vm288, %v548, 0
    %555 = vmatpush.bf16.xpose.msra.mxu0 0
    %556 = vmatpush.bf16.xpose.msra.mxu0 0
    %557 = vmatpush.bf16.xpose.msra.mxu0 0
    %558 = vmatpush.bf16.xpose.msra.mxu0 0
    %559 = vmatpush.bf16.xpose.msra.mxu0 0
    %560 = vmatpush.bf16.xpose.msra.mxu0 0
    %561 = vmatpush.bf16.xpose.msra.mxu0 0
    %562 = vmatpush.bf16.xpose.msra.mxu0 %v553
    %563 = vmatmul.bf16.gmra.mxu0 %v550
    %v564 = vpop.f32.mrf.mxu0
    %v565 = vadd.f32 %v425, %v564
    %v566 = vpop.f32.mrf.mxu0
    %567 = vdwg.mxu0
    %568 = vrot.lane.b32.xlu0 %v455, 112
    %v569 = vpop.permute.xlu0 %568
    %570 = vrot.lane.b32.xlu0 %v455, 80
    %v571 = vpop.permute.xlu0 %570
    %v573 = vsel %vm288, %v569, 0
    %v576 = vsel %vm288, %v571, 0
    %578 = vmatpush.bf16.xpose.msra.mxu0 0
    %579 = vmatpush.bf16.xpose.msra.mxu0 0
    %580 = vmatpush.bf16.xpose.msra.mxu0 0
    %581 = vmatpush.bf16.xpose.msra.mxu0 0
    %582 = vmatpush.bf16.xpose.msra.mxu0 0
    %583 = vmatpush.bf16.xpose.msra.mxu0 0
    %584 = vmatpush.bf16.xpose.msra.mxu0 0
    %585 = vmatpush.bf16.xpose.msra.mxu0 %v576
    %586 = vmatmul.bf16.gmra.mxu0 %v573
    %v587 = vpop.f32.mrf.mxu0
    %v588 = vadd.f32 %v426, %v587
    %v589 = vpop.f32.mrf.mxu0
    %590 = vdwg.mxu0
    %v591 = vsel %vm477, %v565, -inf
    %592 = vmax.xlane.f32.xlu0 %v591
    %v593 = vpop.xlane.xlu0 %592
    %v594 = vsel %vm477, %v588, -inf
    %595 = vmax.xlane.f32.xlu0 %v594
    %v596 = vpop.xlane.xlu0 %595
    %v597 = vsub.f32 %v565, %v593
    %v598 = vsub.f32 %v588, %v596
    %v599 = vmul.f32 %v597, 1.442695
    %v600 = vpow.pop %v599
    %v601 = vmul.f32 %v598, 1.442695
    %v602 = vpow.pop %v601
    %v603 = vsel %vm477, %v600, 0.0
    %604 = vadd.xlane.f32.xlu0 %v603
    %v605 = vpop.xlane.xlu0 %604
    %v606 = vsel %vm477, %v602, 0.0
    %607 = vadd.xlane.f32.xlu0 %v606
    %v608 = vpop.xlane.xlu0 %607
    %v609 = vrcp.pop %v605
    %v610 = vrcp.pop %v608
    %v611 = vmul.f32 %v600, %v609
    %v612 = vmul.f32 %v602, %v610
    %v613 = vpack.c.bf16 %v611, %v611
    %v614 = vpack.c.bf16 %v612, %v612
    %615 = vrot.lane.b32.xlu0 %v431, 48
    %v616 = vpop.permute.xlu0 %615
    %v618 = vsel %vm477, %v613, 0
    %v621 = vsel %vm507, %v616, 0
    %623 = vmatpush.bf16.msra.mxu0 0
    %624 = vmatpush.bf16.msra.mxu0 0
    %625 = vmatpush.bf16.msra.mxu0 0
    %626 = vmatpush.bf16.msra.mxu0 0
    %627 = vmatpush.bf16.msra.mxu0 0
    %628 = vmatpush.bf16.msra.mxu0 0
    %629 = vmatpush.bf16.msra.mxu0 0
    %630 = vmatpush.bf16.msra.mxu0 %v621
    %631 = vmatmul.bf16.gmra.mxu0 %v618
    %v632 = vpop.f32.mrf.mxu0
    %v633 = vadd.f32 0.0, %v632
    %v634 = vpop.f32.mrf.mxu0
    %635 = vdwg.mxu0
    %636 = vrot.lane.b32.xlu0 %v455, 48
    %v637 = vpop.permute.xlu0 %636
    %v639 = vsel %vm477, %v614, 0
    %v642 = vsel %vm507, %v637, 0
    %644 = vmatpush.bf16.msra.mxu0 0
    %645 = vmatpush.bf16.msra.mxu0 0
    %646 = vmatpush.bf16.msra.mxu0 0
    %647 = vmatpush.bf16.msra.mxu0 0
    %648 = vmatpush.bf16.msra.mxu0 0
    %649 = vmatpush.bf16.msra.mxu0 0
    %650 = vmatpush.bf16.msra.mxu0 0
    %651 = vmatpush.bf16.msra.mxu0 %v642
    %652 = vmatmul.bf16.gmra.mxu0 %v639
    %v653 = vpop.f32.mrf.mxu0
    %v654 = vadd.f32 0.0, %v653
    %v655 = vpop.f32.mrf.mxu0
    %656 = vdwg.mxu0
    %659 = vrot.lane.b32.xlu0 %v633, 16
    %v660 = vpop.permute.xlu0 %659
    %661 = vrot.lane.b32.xlu0 %v654, 16
    %v662 = vpop.permute.xlu0 %661
    %v665 = vsel %vm288, %v521, %v660
    %v666 = vsel %vm288, %v542, %v662
    %v667 = vld [vmem:[%s8] sm:$0xf]
    %v668 = vld [vmem:[%s8 + $0x4] sm:$0xf]
    %v669 = vld [vmem:[%s8 + $0x8] sm:$0xf]
    %v670 = vld [vmem:[%s8 + $0xc] sm:$0xf]
    %v671 = vpack.c.bf16 %v666, %v665
    %v672 = vld [vmem:[#allocation13] sm:$0x1]
    %v674 = vperm.slane %v672, 0
    %v680 = vunpack.c.l.b16 %v667
    %v681 = vunpack.c.l.b16 %v668
    %v682 = vunpack.c.l.b16 %v669
    %v683 = vunpack.c.l.b16 %v670
    %v684 = vpack.c.b16 %v681, %v680
    %v685 = vpack.c.b16 %v683, %v682
    %v689 = vsel %vm403, %v671, 0
    %691 = vmatpush.bf16.msra.mxu0 0
    %692 = vmatpush.bf16.msra.mxu0 0
    %693 = vmatpush.bf16.msra.mxu0 0
    %694 = vmatpush.bf16.msra.mxu0 0
    %695 = vmatpush.bf16.msra.mxu0 0
    %696 = vmatpush.bf16.msra.mxu0 0
    %697 = vmatpush.bf16.msra.mxu0 %v685
    %698 = vmatpush.bf16.msra.mxu0 %v684
    %699 = vmatmul.bf16.gmra.mxu0 %v689
    %v700 = vpop.f32.mrf.mxu0
    %v701 = vadd.f32 %v674, %v700
    %v702 = vpop.f32.mrf.mxu0
    %v703 = vadd.f32 %v674, %v702
    %704 = vdwg.mxu0
    %v705 = vadd.f32 %v378, %v701
    %v706 = vadd.f32 %v380, %v703
    %v707 = vld [vmem:[#allocation14] sm:$0x1]
    %v708 = vld [vmem:[#allocation16] sm:$0x1]
    %v709 = vsel %vm403, %v705, 0.0
    %710 = vadd.xlane.f32.xlu0 %v709
    %v711 = vpop.xlane.xlu0 %710
    %v712 = vsel %vm403, %v706, 0.0
    %713 = vadd.xlane.f32.xlu0 %v712
    %v714 = vpop.xlane.xlu0 %713
    %v715 = vrcp.pop 32.0
    %v716 = vmul.f32 32.0, %v715
    %v717 = vsub.f32 1.0, %v716
    %v718 = vmul.f32 %v715, %v717
    %v719 = vadd.f32 %v715, %v718
    %vm720 = vweird.f32 %v715
    %v721 = vsel %vm720, %v715, %v719
    %v722 = vmul.f32 %v711, %v721
    %v723 = vmul.f32 %v714, %v721
    %v724 = vsub.f32 %v705, %v722
    %v725 = vsub.f32 %v706, %v723
    %v726 = vmul.f32 %v724, %v724
    %v727 = vmul.f32 %v725, %v725
    %v728 = vsel %vm403, %v726, 0.0
    %729 = vadd.xlane.f32.xlu0 %v728
    %v730 = vpop.xlane.xlu0 %729
    %v731 = vsel %vm403, %v727, 0.0
    %732 = vadd.xlane.f32.xlu0 %v731
    %v733 = vpop.xlane.xlu0 %732
    %v734 = vmul.f32 %v730, %v721
    %v735 = vmul.f32 %v733, %v721
    %v736 = vadd.f32 %v734, 1e-12
    %v737 = vadd.f32 %v735, 1e-12
    %v738 = vrsqrt.pop %v736
    %v739 = vmul.f32 %v738, %v736
    %v740 = vmul.f32 %v739, %v738
    %v741 = vmul.f32 0.5, %v740
    %v742 = vsub.f32 1.5, %v741
    %v743 = vmul.f32 %v738, %v742
    %vm744 = vweird.f32 %v736
    %vm745 = vweird.f32 %v738
    %vm746 = vmor %vm744, %vm745
    %v747 = vsel %vm746, %v738, %v743
    %v748 = vrsqrt.pop %v737
    %v749 = vmul.f32 %v748, %v737
    %v750 = vmul.f32 %v749, %v748
    %v751 = vmul.f32 0.5, %v750
    %v752 = vsub.f32 1.5, %v751
    %v753 = vmul.f32 %v748, %v752
    %vm754 = vweird.f32 %v737
    %vm755 = vweird.f32 %v748
    %vm756 = vmor %vm754, %vm755
    %v757 = vsel %vm756, %v748, %v753
    %v758 = vmul.f32 %v724, %v747
    %v759 = vmul.f32 %v725, %v757
    %v761 = vperm.slane %v707, 0
    %v763 = vmul.f32 %v758, %v761
    %v764 = vmul.f32 %v759, %v761
    %v766 = vperm.slane %v708, 0
    %v768 = vadd.f32 %v763, %v766
    %v769 = vadd.f32 %v764, %v766
    %v770 = vld [vmem:[#allocation17] sm:$0xf]
    %v771 = vld [vmem:[#allocation17 + $0x4] sm:$0xf]
    %v772 = vld [vmem:[#allocation17 + $0x8] sm:$0xf]
    %v773 = vld [vmem:[#allocation17 + $0xc] sm:$0xf]
    %v774 = vpack.c.bf16 %v769, %v768
    %v775 = vld [vmem:[#allocation19] sm:$0x1]
    %v777 = vperm.slane %v775, 0
    %v783 = vunpack.c.l.b16 %v770
    %v784 = vunpack.c.l.b16 %v771
    %v785 = vunpack.c.l.b16 %v772
    %v786 = vunpack.c.l.b16 %v773
    %v787 = vpack.c.b16 %v784, %v783
    %v788 = vpack.c.b16 %v786, %v785
    %v792 = vsel %vm403, %v774, 0
    %794 = vmatpush.bf16.msra.mxu0 0
    %795 = vmatpush.bf16.msra.mxu0 0
    %796 = vmatpush.bf16.msra.mxu0 0
    %797 = vmatpush.bf16.msra.mxu0 0
    %798 = vmatpush.bf16.msra.mxu0 0
    %799 = vmatpush.bf16.msra.mxu0 0
    %800 = vmatpush.bf16.msra.mxu0 %v788
    %801 = vmatpush.bf16.msra.mxu0 %v787
    %802 = vmatmul.bf16.gmra.mxu0 %v792
    %v803 = vpop.f32.mrf.mxu0
    %v804 = vadd.f32 %v777, %v803
    %v805 = vpop.f32.mrf.mxu0
    %v806 = vadd.f32 %v777, %v805
    %807 = vdwg.mxu0
    %v808 = vmul.f32 %v804, %v804
    %v809 = vmul.f32 %v806, %v806
    %v810 = vmul.f32 %v804, %v808
    %v811 = vmul.f32 %v806, %v809
    %v812 = vmul.f32 %v810, 0.044715
    %v813 = vmul.f32 %v811, 0.044715
    %v814 = vadd.f32 %v804, %v812
    %v815 = vadd.f32 %v806, %v813
    %v816 = vmul.f32 %v814, 0.7978846
    %v817 = vmul.f32 %v815, 0.7978846
    %v818 = vtanh.pop %v816
    %v819 = vtanh.pop %v817
    %v820 = vadd.f32 %v818, 1.0
    %v821 = vadd.f32 %v819, 1.0
    %v822 = vmul.f32 %v820, 0.5
    %v823 = vmul.f32 %v821, 0.5
    %v824 = vmul.f32 %v804, %v822
    %v825 = vmul.f32 %v806, %v823
    %v826 = vld [vmem:[%s14] sm:$0xf]
    %v827 = vld [vmem:[%s14 + $0x4] sm:$0xf]
    %v828 = vld [vmem:[%s14 + $0x8] sm:$0xf]
    %v829 = vld [vmem:[%s14 + $0xc] sm:$0xf]
    %v830 = vld [vmem:[%s14 + $0x10] sm:$0xf]
    %v831 = vld [vmem:[%s14 + $0x14] sm:$0xf]
    %v832 = vld [vmem:[%s14 + $0x18] sm:$0xf]
    %v833 = vld [vmem:[%s14 + $0x1c] sm:$0xf]
    %v834 = vpack.c.bf16 %v825, %v824
    %v835 = vld [vmem:[#allocation20] sm:$0x1]
    %v837 = vperm.slane %v835, 0
    %v847 = vunpack.c.l.b16 %v826
    %v848 = vunpack.c.l.b16 %v827
    %v849 = vunpack.c.l.b16 %v828
    %v850 = vunpack.c.l.b16 %v829
    %v851 = vunpack.c.l.b16 %v830
    %v852 = vunpack.c.l.b16 %v831
    %v853 = vunpack.c.l.b16 %v832
    %v854 = vunpack.c.l.b16 %v833
    %v855 = vpack.c.b16 %v848, %v847
    %v856 = vpack.c.b16 %v850, %v849
    %v857 = vpack.c.b16 %v852, %v851
    %v858 = vpack.c.b16 %v854, %v853
    %vm863 = vcmask 523264
    %v865 = vsel %vm863, %v834, 0
    %867 = vmatpush.bf16.msra.mxu0 0
    %868 = vmatpush.bf16.msra.mxu0 0
    %869 = vmatpush.bf16.msra.mxu0 0
    %870 = vmatpush.bf16.msra.mxu0 0
    %871 = vmatpush.bf16.msra.mxu0 %v858
    %872 = vmatpush.bf16.msra.mxu0 %v857
    %873 = vmatpush.bf16.msra.mxu0 %v856
    %874 = vmatpush.bf16.msra.mxu0 %v855
    %875 = vmatmul.bf16.gmra.mxu0 %v865
    %v876 = vpop.f32.mrf.mxu0
    %v877 = vadd.f32 %v837, %v876
    %v878 = vpop.f32.mrf.mxu0
    %v879 = vadd.f32 %v837, %v878
    %880 = vdwg.mxu0
    %v881 = vadd.f32 %v768, %v877
    %v882 = vadd.f32 %v769, %v879
    %v883 = vld [vmem:[#allocation22] sm:$0x1]
    %v884 = vld [vmem:[#allocation23] sm:$0x1]
    %v885 = vsel %vm403, %v881, 0.0
    %886 = vadd.xlane.f32.xlu0 %v885
    %v887 = vpop.xlane.xlu0 %886
    %v888 = vsel %vm403, %v882, 0.0
    %889 = vadd.xlane.f32.xlu0 %v888
    %v890 = vpop.xlane.xlu0 %889
    %v891 = vmul.f32 %v887, %v721
    %v892 = vmul.f32 %v890, %v721
    %v893 = vsub.f32 %v881, %v891
    %v894 = vsub.f32 %v882, %v892
    %v895 = vmul.f32 %v893, %v893
    %v896 = vmul.f32 %v894, %v894
    %v897 = vsel %vm403, %v895, 0.0
    %898 = vadd.xlane.f32.xlu0 %v897
    %v899 = vpop.xlane.xlu0 %898
    %v900 = vsel %vm403, %v896, 0.0
    %901 = vadd.xlane.f32.xlu0 %v900
    %v902 = vpop.xlane.xlu0 %901
    %v903 = vmul.f32 %v899, %v721
    %v904 = vmul.f32 %v902, %v721
    %v905 = vadd.f32 %v903, 1e-12
    %v906 = vadd.f32 %v904, 1e-12
    %v907 = vrsqrt.pop %v905
    %v908 = vmul.f32 %v907, %v905
    %v909 = vmul.f32 %v908, %v907
    %v910 = vmul.f32 0.5, %v909
    %v911 = vsub.f32 1.5, %v910
    %v912 = vmul.f32 %v907, %v911
    %vm913 = vweird.f32 %v905
    %vm914 = vweird.f32 %v907
    %vm915 = vmor %vm913, %vm914
    %v916 = vsel %vm915, %v907, %v912
    %v917 = vrsqrt.pop %v906
    %v918 = vmul.f32 %v917, %v906
    %v919 = vmul.f32 %v918, %v917
    %v920 = vmul.f32 0.5, %v919
    %v921 = vsub.f32 1.5, %v920
    %v922 = vmul.f32 %v917, %v921
    %vm923 = vweird.f32 %v906
    %vm924 = vweird.f32 %v917
    %vm925 = vmor %vm923, %vm924
    %v926 = vsel %vm925, %v917, %v922
    %v927 = vmul.f32 %v893, %v916
    %v928 = vmul.f32 %v894, %v926
    %v930 = vperm.slane %v883, 0
    %v932 = vmul.f32 %v927, %v930
    %v933 = vmul.f32 %v928, %v930
    %v935 = vperm.slane %v884, 0
    %v937 = vadd.f32 %v932, %v935
    %v938 = vadd.f32 %v933, %v935
    %v939 = vpack.c.bf16 %v938, %v937
    %v941 = vsel %vm403, %v939, 0
    %943 = vmatpush.bf16.msra.mxu0 0
    %944 = vmatpush.bf16.msra.mxu0 0
    %945 = vmatpush.bf16.msra.mxu0 0
    %946 = vmatpush.bf16.msra.mxu0 0
    %947 = vmatpush.bf16.msra.mxu0 0
    %948 = vmatpush.bf16.msra.mxu0 0
    %949 = vmatpush.bf16.msra.mxu0 %v400
    %950 = vmatpush.bf16.msra.mxu0 %v399
    %951 = vmatmul.bf16.gmra.mxu0 %v941
    %v952 = vpop.f32.mrf.mxu0
    %v953 = vadd.f32 %v389, %v952
    %v954 = vpop.f32.mrf.mxu0
    %v955 = vadd.f32 %v389, %v954
    %956 = vdwg.mxu0
    %v957 = vpack.c.bf16 %v953, %v953
    %v958 = vpack.c.bf16 %v955, %v955
    %v960 = vunpack.c.l.b16 %v957
    %v961 = vpack.c.b16 %v960, %v960
    %962 = vrot.lane.b32.xlu0 %v961, 96
    %v963 = vpop.permute.xlu0 %962
    %v965 = vsel %vm288, %v957, 0
    %v968 = vsel %vm288, %v963, 0
    %970 = vmatpush.bf16.xpose.msra.mxu0 0
    %971 = vmatpush.bf16.xpose.msra.mxu0 0
    %972 = vmatpush.bf16.xpose.msra.mxu0 0
    %973 = vmatpush.bf16.xpose.msra.mxu0 0
    %974 = vmatpush.bf16.xpose.msra.mxu0 0
    %975 = vmatpush.bf16.xpose.msra.mxu0 0
    %976 = vmatpush.bf16.xpose.msra.mxu0 0
    %977 = vmatpush.bf16.xpose.msra.mxu0 %v968
    %978 = vmatmul.bf16.gmra.mxu0 %v965
    %v979 = vpop.f32.mrf.mxu0
    %v980 = vadd.f32 %v425, %v979
    %v981 = vpop.f32.mrf.mxu0
    %982 = vdwg.mxu0
    %v984 = vunpack.c.l.b16 %v958
    %v985 = vpack.c.b16 %v984, %v984
    %986 = vrot.lane.b32.xlu0 %v985, 96
    %v987 = vpop.permute.xlu0 %986
    %v989 = vsel %vm288, %v958, 0
    %v992 = vsel %vm288, %v987, 0
    %994 = vmatpush.bf16.xpose.msra.mxu0 0
    %995 = vmatpush.bf16.xpose.msra.mxu0 0
    %996 = vmatpush.bf16.xpose.msra.mxu0 0
    %997 = vmatpush.bf16.xpose.msra.mxu0 0
    %998 = vmatpush.bf16.xpose.msra.mxu0 0
    %999 = vmatpush.bf16.xpose.msra.mxu0 0
    %1000 = vmatpush.bf16.xpose.msra.mxu0 0
    %1001 = vmatpush.bf16.xpose.msra.mxu0 %v992
    %1002 = vmatmul.bf16.gmra.mxu0 %v989
    %v1003 = vpop.f32.mrf.mxu0
    %v1004 = vadd.f32 %v426, %v1003
    %v1005 = vpop.f32.mrf.mxu0
    %1006 = vdwg.mxu0
    %v1007 = vsel %vm477, %v980, -inf
    %1008 = vmax.xlane.f32.xlu0 %v1007
    %v1009 = vpop.xlane.xlu0 %1008
    %v1010 = vsel %vm477, %v1004, -inf
    %1011 = vmax.xlane.f32.xlu0 %v1010
    %v1012 = vpop.xlane.xlu0 %1011
    %v1013 = vsub.f32 %v980, %v1009
    %v1014 = vsub.f32 %v1004, %v1012
    %v1015 = vmul.f32 %v1013, 1.442695
    %v1016 = vpow.pop %v1015
    %v1017 = vmul.f32 %v1014, 1.442695
    %v1018 = vpow.pop %v1017
    %v1019 = vsel %vm477, %v1016, 0.0
    %1020 = vadd.xlane.f32.xlu0 %v1019
    %v1021 = vpop.xlane.xlu0 %1020
    %v1022 = vsel %vm477, %v1018, 0.0
    %1023 = vadd.xlane.f32.xlu0 %v1022
    %v1024 = vpop.xlane.xlu0 %1023
    %v1025 = vrcp.pop %v1021
    %v1026 = vrcp.pop %v1024
    %v1027 = vmul.f32 %v1016, %v1025
    %v1028 = vmul.f32 %v1018, %v1026
    %v1029 = vpack.c.bf16 %v1027, %v1027
    %v1030 = vpack.c.bf16 %v1028, %v1028
    %1031 = vrot.lane.b32.xlu0 %v961, 64
    %v1032 = vpop.permute.xlu0 %1031
    %v1034 = vsel %vm477, %v1029, 0
    %v1037 = vsel %vm507, %v1032, 0
    %1039 = vmatpush.bf16.msra.mxu0 0
    %1040 = vmatpush.bf16.msra.mxu0 0
    %1041 = vmatpush.bf16.msra.mxu0 0
    %1042 = vmatpush.bf16.msra.mxu0 0
    %1043 = vmatpush.bf16.msra.mxu0 0
    %1044 = vmatpush.bf16.msra.mxu0 0
    %1045 = vmatpush.bf16.msra.mxu0 0
    %1046 = vmatpush.bf16.msra.mxu0 %v1037
    %1047 = vmatmul.bf16.gmra.mxu0 %v1034
    %v1048 = vpop.f32.mrf.mxu0
    %v1049 = vadd.f32 0.0, %v1048
    %v1050 = vpop.f32.mrf.mxu0
    %1051 = vdwg.mxu0
    %1052 = vrot.lane.b32.xlu0 %v985, 64
    %v1053 = vpop.permute.xlu0 %1052
    %v1055 = vsel %vm477, %v1030, 0
    %v1058 = vsel %vm507, %v1053, 0
    %1060 = vmatpush.bf16.msra.mxu0 0
    %1061 = vmatpush.bf16.msra.mxu0 0
    %1062 = vmatpush.bf16.msra.mxu0 0
    %1063 = vmatpush.bf16.msra.mxu0 0
    %1064 = vmatpush.bf16.msra.mxu0 0
    %1065 = vmatpush.bf16.msra.mxu0 0
    %1066 = vmatpush.bf16.msra.mxu0 0
    %1067 = vmatpush.bf16.msra.mxu0 %v1058
    %1068 = vmatmul.bf16.gmra.mxu0 %v1055
    %v1069 = vpop.f32.mrf.mxu0
    %v1070 = vadd.f32 0.0, %v1069
    %v1071 = vpop.f32.mrf.mxu0
    %1072 = vdwg.mxu0
    %1073 = vrot.lane.b32.xlu0 %v961, 112
    %v1074 = vpop.permute.xlu0 %1073
    %1075 = vrot.lane.b32.xlu0 %v961, 80
    %v1076 = vpop.permute.xlu0 %1075
    %v1078 = vsel %vm288, %v1074, 0
    %v1081 = vsel %vm288, %v1076, 0
    %1083 = vmatpush.bf16.xpose.msra.mxu0 0
    %1084 = vmatpush.bf16.xpose.msra.mxu0 0
    %1085 = vmatpush.bf16.xpose.msra.mxu0 0
    %1086 = vmatpush.bf16.xpose.msra.mxu0 0
    %1087 = vmatpush.bf16.xpose.msra.mxu0 0
    %1088 = vmatpush.bf16.xpose.msra.mxu0 0
    %1089 = vmatpush.bf16.xpose.msra.mxu0 0
    %1090 = vmatpush.bf16.xpose.msra.mxu0 %v1081
    %1091 = vmatmul.bf16.gmra.mxu0 %v1078
    %v1092 = vpop.f32.mrf.mxu0
    %v1093 = vadd.f32 %v425, %v1092
    %v1094 = vpop.f32.mrf.mxu0
    %1095 = vdwg.mxu0
    %1096 = vrot.lane.b32.xlu0 %v985, 112
    %v1097 = vpop.permute.xlu0 %1096
    %1098 = vrot.lane.b32.xlu0 %v985, 80
    %v1099 = vpop.permute.xlu0 %1098
    %v1101 = vsel %vm288, %v1097, 0
    %v1104 = vsel %vm288, %v1099, 0
    %1106 = vmatpush.bf16.xpose.msra.mxu0 0
    %1107 = vmatpush.bf16.xpose.msra.mxu0 0
    %1108 = vmatpush.bf16.xpose.msra.mxu0 0
    %1109 = vmatpush.bf16.xpose.msra.mxu0 0
    %1110 = vmatpush.bf16.xpose.msra.mxu0 0
    %1111 = vmatpush.bf16.xpose.msra.mxu0 0
    %1112 = vmatpush.bf16.xpose.msra.mxu0 0
    %1113 = vmatpush.bf16.xpose.msra.mxu0 %v1104
    %1114 = vmatmul.bf16.gmra.mxu0 %v1101
    %v1115 = vpop.f32.mrf.mxu0
    %v1116 = vadd.f32 %v426, %v1115
    %v1117 = vpop.f32.mrf.mxu0
    %1118 = vdwg.mxu0
    %v1119 = vsel %vm477, %v1093, -inf
    %1120 = vmax.xlane.f32.xlu0 %v1119
    %v1121 = vpop.xlane.xlu0 %1120
    %v1122 = vsel %vm477, %v1116, -inf
    %1123 = vmax.xlane.f32.xlu0 %v1122
    %v1124 = vpop.xlane.xlu0 %1123
    %v1125 = vsub.f32 %v1093, %v1121
    %v1126 = vsub.f32 %v1116, %v1124
    %v1127 = vmul.f32 %v1125, 1.442695
    %v1128 = vpow.pop %v1127
    %v1129 = vmul.f32 %v1126, 1.442695
    %v1130 = vpow.pop %v1129
    %v1131 = vsel %vm477, %v1128, 0.0
    %1132 = vadd.xlane.f32.xlu0 %v1131
    %v1133 = vpop.xlane.xlu0 %1132
    %v1134 = vsel %vm477, %v1130, 0.0
    %1135 = vadd.xlane.f32.xlu0 %v1134
    %v1136 = vpop.xlane.xlu0 %1135
    %v1137 = vrcp.pop %v1133
    %v1138 = vrcp.pop %v1136
    %v1139 = vmul.f32 %v1128, %v1137
    %v1140 = vmul.f32 %v1130, %v1138
    %v1141 = vpack.c.bf16 %v1139, %v1139
    %v1142 = vpack.c.bf16 %v1140, %v1140
    %1143 = vrot.lane.b32.xlu0 %v961, 48
    %v1144 = vpop.permute.xlu0 %1143
    %v1146 = vsel %vm477, %v1141, 0
    %v1149 = vsel %vm507, %v1144, 0
    %1151 = vmatpush.bf16.msra.mxu0 0
    %1152 = vmatpush.bf16.msra.mxu0 0
    %1153 = vmatpush.bf16.msra.mxu0 0
    %1154 = vmatpush.bf16.msra.mxu0 0
    %1155 = vmatpush.bf16.msra.mxu0 0
    %1156 = vmatpush.bf16.msra.mxu0 0
    %1157 = vmatpush.bf16.msra.mxu0 0
    %1158 = vmatpush.bf16.msra.mxu0 %v1149
    %1159 = vmatmul.bf16.gmra.mxu0 %v1146
    %v1160 = vpop.f32.mrf.mxu0
    %v1161 = vadd.f32 0.0, %v1160
    %v1162 = vpop.f32.mrf.mxu0
    %1163 = vdwg.mxu0
    %1164 = vrot.lane.b32.xlu0 %v985, 48
    %v1165 = vpop.permute.xlu0 %1164
    %v1167 = vsel %vm477, %v1142, 0
    %v1170 = vsel %vm507, %v1165, 0
    %1172 = vmatpush.bf16.msra.mxu0 0
    %1173 = vmatpush.bf16.msra.mxu0 0
    %1174 = vmatpush.bf16.msra.mxu0 0
    %1175 = vmatpush.bf16.msra.mxu0 0
    %1176 = vmatpush.bf16.msra.mxu0 0
    %1177 = vmatpush.bf16.msra.mxu0 0
    %1178 = vmatpush.bf16.msra.mxu0 0
    %1179 = vmatpush.bf16.msra.mxu0 %v1170
    %1180 = vmatmul.bf16.gmra.mxu0 %v1167
    %v1181 = vpop.f32.mrf.mxu0
    %v1182 = vadd.f32 0.0, %v1181
    %v1183 = vpop.f32.mrf.mxu0
    %1184 = vdwg.mxu0
    %1187 = vrot.lane.b32.xlu0 %v1161, 16
    %v1188 = vpop.permute.xlu0 %1187
    %1189 = vrot.lane.b32.xlu0 %v1182, 16
    %v1190 = vpop.permute.xlu0 %1189
    %v1193 = vsel %vm288, %v1049, %v1188
    %v1194 = vsel %vm288, %v1070, %v1190
    %v1195 = vpack.c.bf16 %v1194, %v1193
    %v1197 = vsel %vm403, %v1195, 0
    %1199 = vmatpush.bf16.msra.mxu0 0
    %1200 = vmatpush.bf16.msra.mxu0 0
    %1201 = vmatpush.bf16.msra.mxu0 0
    %1202 = vmatpush.bf16.msra.mxu0 0
    %1203 = vmatpush.bf16.msra.mxu0 0
    %1204 = vmatpush.bf16.msra.mxu0 0
    %1205 = vmatpush.bf16.msra.mxu0 %v685
    %1206 = vmatpush.bf16.msra.mxu0 %v684
    %1207 = vmatmul.bf16.gmra.mxu0 %v1197
    %v1208 = vpop.f32.mrf.mxu0
    %v1209 = vadd.f32 %v674, %v1208
    %v1210 = vpop.f32.mrf.mxu0
    %v1211 = vadd.f32 %v674, %v1210
    %1212 = vdwg.mxu0
    %v1213 = vadd.f32 %v937, %v1209
    %v1214 = vadd.f32 %v938, %v1211
    %v1215 = vsel %vm403, %v1213, 0.0
    %1216 = vadd.xlane.f32.xlu0 %v1215
    %v1217 = vpop.xlane.xlu0 %1216
    %v1218 = vsel %vm403, %v1214, 0.0
    %1219 = vadd.xlane.f32.xlu0 %v1218
    %v1220 = vpop.xlane.xlu0 %1219
    %v1221 = vmul.f32 %v1217, %v721
    %v1222 = vmul.f32 %v1220, %v721
    %v1223 = vsub.f32 %v1213, %v1221
    %v1224 = vsub.f32 %v1214, %v1222
    %v1225 = vmul.f32 %v1223, %v1223
    %v1226 = vmul.f32 %v1224, %v1224
    %v1227 = vsel %vm403, %v1225, 0.0
    %1228 = vadd.xlane.f32.xlu0 %v1227
    %v1229 = vpop.xlane.xlu0 %1228
    %v1230 = vsel %vm403, %v1226, 0.0
    %1231 = vadd.xlane.f32.xlu0 %v1230
    %v1232 = vpop.xlane.xlu0 %1231
    %v1233 = vmul.f32 %v1229, %v721
    %v1234 = vmul.f32 %v1232, %v721
    %v1235 = vadd.f32 %v1233, 1e-12
    %v1236 = vadd.f32 %v1234, 1e-12
    %v1237 = vrsqrt.pop %v1235
    %v1238 = vmul.f32 %v1237, %v1235
    %v1239 = vmul.f32 %v1238, %v1237
    %v1240 = vmul.f32 0.5, %v1239
    %v1241 = vsub.f32 1.5, %v1240
    %v1242 = vmul.f32 %v1237, %v1241
    %vm1243 = vweird.f32 %v1235
    %vm1244 = vweird.f32 %v1237
    %vm1245 = vmor %vm1243, %vm1244
    %v1246 = vsel %vm1245, %v1237, %v1242
    %v1247 = vrsqrt.pop %v1236
    %v1248 = vmul.f32 %v1247, %v1236
    %v1249 = vmul.f32 %v1248, %v1247
    %v1250 = vmul.f32 0.5, %v1249
    %v1251 = vsub.f32 1.5, %v1250
    %v1252 = vmul.f32 %v1247, %v1251
    %vm1253 = vweird.f32 %v1236
    %vm1254 = vweird.f32 %v1247
    %vm1255 = vmor %vm1253, %vm1254
    %v1256 = vsel %vm1255, %v1247, %v1252
    %v1257 = vmul.f32 %v1223, %v1246
    %v1258 = vmul.f32 %v1224, %v1256
    %v1259 = vmul.f32 %v1257, %v761
    %v1260 = vmul.f32 %v1258, %v761
    %v1261 = vadd.f32 %v1259, %v766
    %v1262 = vadd.f32 %v1260, %v766
    %v1263 = vpack.c.bf16 %v1262, %v1261
    %v1265 = vsel %vm403, %v1263, 0
    %1267 = vmatpush.bf16.msra.mxu0 0
    %1268 = vmatpush.bf16.msra.mxu0 0
    %1269 = vmatpush.bf16.msra.mxu0 0
    %1270 = vmatpush.bf16.msra.mxu0 0
    %1271 = vmatpush.bf16.msra.mxu0 0
    %1272 = vmatpush.bf16.msra.mxu0 0
    %1273 = vmatpush.bf16.msra.mxu0 %v788
    %1274 = vmatpush.bf16.msra.mxu0 %v787
    %1275 = vmatmul.bf16.gmra.mxu0 %v1265
    %v1276 = vpop.f32.mrf.mxu0
    %v1277 = vadd.f32 %v777, %v1276
    %v1278 = vpop.f32.mrf.mxu0
    %v1279 = vadd.f32 %v777, %v1278
    %1280 = vdwg.mxu0
    %v1281 = vmul.f32 %v1277, %v1277
    %v1282 = vmul.f32 %v1279, %v1279
    %v1283 = vmul.f32 %v1277, %v1281
    %v1284 = vmul.f32 %v1279, %v1282
    %v1285 = vmul.f32 %v1283, 0.044715
    %v1286 = vmul.f32 %v1284, 0.044715
    %v1287 = vadd.f32 %v1277, %v1285
    %v1288 = vadd.f32 %v1279, %v1286
    %v1289 = vmul.f32 %v1287, 0.7978846
    %v1290 = vmul.f32 %v1288, 0.7978846
    %v1291 = vtanh.pop %v1289
    %v1292 = vtanh.pop %v1290
    %v1293 = vadd.f32 %v1291, 1.0
    %v1294 = vadd.f32 %v1292, 1.0
    %v1295 = vmul.f32 %v1293, 0.5
    %v1296 = vmul.f32 %v1294, 0.5
    %v1297 = vmul.f32 %v1277, %v1295
    %v1298 = vmul.f32 %v1279, %v1296
    %v1299 = vpack.c.bf16 %v1298, %v1297
    %v1301 = vsel %vm863, %v1299, 0
    %1303 = vmatpush.bf16.msra.mxu0 0
    %1304 = vmatpush.bf16.msra.mxu0 0
    %1305 = vmatpush.bf16.msra.mxu0 0
    %1306 = vmatpush.bf16.msra.mxu0 0
    %1307 = vmatpush.bf16.msra.mxu0 %v858
    %1308 = vmatpush.bf16.msra.mxu0 %v857
    %1309 = vmatpush.bf16.msra.mxu0 %v856
    %1310 = vmatpush.bf16.msra.mxu0 %v855
    %1311 = vmatmul.bf16.gmra.mxu0 %v1301
    %v1312 = vpop.f32.mrf.mxu0
    %v1313 = vadd.f32 %v837, %v1312
    %v1314 = vpop.f32.mrf.mxu0
    %v1315 = vadd.f32 %v837, %v1314
    %1316 = vdwg.mxu0
    %v1317 = vadd.f32 %v1261, %v1313
    %v1318 = vadd.f32 %v1262, %v1315
    %v1319 = vsel %vm403, %v1317, 0.0
    %1320 = vadd.xlane.f32.xlu0 %v1319
    %v1321 = vpop.xlane.xlu0 %1320
    %v1322 = vsel %vm403, %v1318, 0.0
    %1323 = vadd.xlane.f32.xlu0 %v1322
    %v1324 = vpop.xlane.xlu0 %1323
    %v1325 = vmul.f32 %v1321, %v721
    %v1326 = vmul.f32 %v1324, %v721
    %v1327 = vsub.f32 %v1317, %v1325
    %v1328 = vsub.f32 %v1318, %v1326
    %v1329 = vmul.f32 %v1327, %v1327
    %v1330 = vmul.f32 %v1328, %v1328
    %v1331 = vsel %vm403, %v1329, 0.0
    %1332 = vadd.xlane.f32.xlu0 %v1331
    %v1333 = vpop.xlane.xlu0 %1332
    %v1334 = vsel %vm403, %v1330, 0.0
    %1335 = vadd.xlane.f32.xlu0 %v1334
    %v1336 = vpop.xlane.xlu0 %1335
    %v1337 = vmul.f32 %v1333, %v721
    %v1338 = vmul.f32 %v1336, %v721
    %v1339 = vadd.f32 %v1337, 1e-12
    %v1340 = vadd.f32 %v1338, 1e-12
    %v1341 = vrsqrt.pop %v1339
    %v1342 = vmul.f32 %v1341, %v1339
    %v1343 = vmul.f32 %v1342, %v1341
    %v1344 = vmul.f32 0.5, %v1343
    %v1345 = vsub.f32 1.5, %v1344
    %v1346 = vmul.f32 %v1341, %v1345
    %vm1347 = vweird.f32 %v1339
    %vm1348 = vweird.f32 %v1341
    %vm1349 = vmor %vm1347, %vm1348
    %v1350 = vsel %vm1349, %v1341, %v1346
    %v1351 = vrsqrt.pop %v1340
    %v1352 = vmul.f32 %v1351, %v1340
    %v1353 = vmul.f32 %v1352, %v1351
    %v1354 = vmul.f32 0.5, %v1353
    %v1355 = vsub.f32 1.5, %v1354
    %v1356 = vmul.f32 %v1351, %v1355
    %vm1357 = vweird.f32 %v1340
    %vm1358 = vweird.f32 %v1351
    %vm1359 = vmor %vm1357, %vm1358
    %v1360 = vsel %vm1359, %v1351, %v1356
    %v1361 = vmul.f32 %v1327, %v1350
    %v1362 = vmul.f32 %v1328, %v1360
    %v1363 = vmul.f32 %v1361, %v930
    %v1364 = vmul.f32 %v1362, %v930
    %v1365 = vadd.f32 %v1363, %v935
    %v1366 = vadd.f32 %v1364, %v935
    %v1367 = vld [vmem:[%s18] sm:$0xf]
    %v1368 = vld [vmem:[%s18 + $0x4] sm:$0xf]
    %v1369 = vld [vmem:[%s18 + $0x8] sm:$0xf]
    %v1370 = vld [vmem:[%s18 + $0xc] sm:$0xf]
    %v1371 = vpack.c.bf16 %v1366, %v1365
    %v1372 = vld [vmem:[%s19] sm:$0x1]
    %v1374 = vperm.slane %v1372, 0
    %v1380 = vunpack.c.l.b16 %v1367
    %v1381 = vunpack.c.l.b16 %v1368
    %v1382 = vunpack.c.l.b16 %v1369
    %v1383 = vunpack.c.l.b16 %v1370
    %v1384 = vpack.c.b16 %v1381, %v1380
    %v1385 = vpack.c.b16 %v1383, %v1382
    %v1389 = vsel %vm403, %v1371, 0
    %1391 = vmatpush.bf16.msra.mxu0 0
    %1392 = vmatpush.bf16.msra.mxu0 0
    %1393 = vmatpush.bf16.msra.mxu0 0
    %1394 = vmatpush.bf16.msra.mxu0 0
    %1395 = vmatpush.bf16.msra.mxu0 0
    %1396 = vmatpush.bf16.msra.mxu0 0
    %1397 = vmatpush.bf16.msra.mxu0 %v1385
    %1398 = vmatpush.bf16.msra.mxu0 %v1384
    %1399 = vmatmul.bf16.gmra.mxu0 %v1389
    %v1400 = vpop.f32.mrf.mxu0
    %v1401 = vadd.f32 %v1374, %v1400
    %v1402 = vpop.f32.mrf.mxu0
    %v1403 = vadd.f32 %v1374, %v1402
    %1404 = vdwg.mxu0
    %v1405 = vtanh.pop %v1401
    %v1406 = vtanh.pop %v1403
    %v1407 = vld [vmem:[#allocation25] sm:$0xf]
    %v1408 = vld [vmem:[#allocation25 + $0x4] sm:$0xf]
    %v1409 = vld [vmem:[#allocation25 + $0x8] sm:$0xf]
    %v1410 = vld [vmem:[#allocation25 + $0xc] sm:$0xf]
    %v1411 = vpack.c.bf16 %v1406, %v1405
    %v1412 = vld [vmem:[%s21] sm:$0x1]
    %v1414 = vperm.slane %v1412, 0
    %v1420 = vunpack.c.l.b16 %v1407
    %v1421 = vunpack.c.l.b16 %v1408
    %v1422 = vunpack.c.l.b16 %v1409
    %v1423 = vunpack.c.l.b16 %v1410
    %v1424 = vpack.c.b16 %v1421, %v1420
    %v1425 = vpack.c.b16 %v1423, %v1422
    %v1429 = vsel %vm403, %v1411, 0
    %1431 = vmatpush.bf16.msra.mxu0 0
    %1432 = vmatpush.bf16.msra.mxu0 0
    %1433 = vmatpush.bf16.msra.mxu0 0
    %1434 = vmatpush.bf16.msra.mxu0 0
    %1435 = vmatpush.bf16.msra.mxu0 0
    %1436 = vmatpush.bf16.msra.mxu0 0
    %1437 = vmatpush.bf16.msra.mxu0 %v1425
    %1438 = vmatpush.bf16.msra.mxu0 %v1424
    %1439 = vmatmul.bf16.gmra.mxu0 %v1429
    %v1440 = vpop.f32.mrf.mxu0
    %v1441 = vadd.f32 %v1414, %v1440
    %v1442 = vpop.f32.mrf.mxu0
    %v1443 = vadd.f32 %v1414, %v1442
    %1444 = vdwg.mxu0
    %1445 = vst [vmem:[#allocation26] sm:$0xff] %v1441
    %1446 = vst [vmem:[#allocation26 + $0x8] sm:$0xff] %v1443
    // Predicated region
    $region150: #{tpu_custom_call.1} parent=1 // pred_check
      _
    $region151: #{tpu_custom_call.1} parent=1 // pred_check_branch
      %1448 = sbr.rel (0) target = $region153
    $region152: #{tpu_custom_call.1} parent=1 // pred_region
      %1450 = vsyncadd [#allocation4], 0
      %s1451 = sshll.u32 [#allocation26], 4
      %s1452 = int_to_ptr.vmem [resolvable:$true] %s1451
      %s1453 = sshll.u32 %s22, 4
      %s1454 = int_to_ptr.hbm [resolvable:$true] %s1453
      %1459 = dma.vmem_to_hbm [thread:$0]  %s1452, 256, %s1454, [#allocation4], 128, 128, 8
    $region153: #{tpu_custom_call.1} parent=1 // pred_fallthru
      _
    // Predicated region
    $region154: #{tpu_custom_call.1} parent=1 // pred_check
      _
    $region155: #{tpu_custom_call.1} parent=1 // pred_check_branch
      %1461 = sbr.rel (0) target = $region157
    $region156: #{tpu_custom_call.1} parent=1 // pred_region
      %1463 = dma.done [#allocation4], 256
    $region157: #{tpu_custom_call.1} parent=1 // pred_fallthru
      _
    %1464 = vsyncpa [#allocation3], 1
    %1465 = vsyncpa [#allocation6], 1
    %1466 = vsyncpa [#allocation9], 1
    %1467 = vsyncpa [#allocation12], 1
    %1468 = vsyncpa [#allocation15], 1
    %1469 = vsyncpa [#allocation18], 1
    %1470 = vsyncpa [#allocation21], 1
    %1471 = vsyncpa [#allocation24], 1
    %1472 = vsyncpa [#allocation4], 1

</llo_original>
